<compile_context>
chip_gen: v6e
topology: v6e:2x2x1
jax: 0.10.0
libtpu: 0.0.40
codegen_flags: <defaults>
</compile_context>

<pallas_src>
import functools

import jax
import jax.numpy as jnp
from jax import lax
from jax.experimental import pallas as pl
from jax.experimental.pallas import tpu as pltpu


def _mha_kernel(x_ref, wqkv_ref, bqkv_ref, wproj_ref, bproj_ref, mask_ref,
                o_ref, qkv_ref, a_ref, negmask_ref, *, n_head, tq):
    # x_ref:       (1, T, NX)   activations (full sequence for this batch elem)
    # wqkv_ref:    (NX, 3*NX)   c_attn weight, bf16 (Q columns pre-scaled)
    # bqkv_ref:    (1, 3*NX)    c_attn bias, f32 (Q part pre-scaled)
    # wproj_ref:   (NX, NX)     c_proj weight, bf16
    # bproj_ref:   (1, NX)      c_proj bias, f32
    # mask_ref:    (1, tq, T)   attention-mask tile (1 = masked), bf16
    # o_ref:       (1, tq, NX)  output tile, f32
    # qkv_ref:     (T, 3*NX)    VMEM scratch: Q|K|V for the whole seq, bf16
    # a_ref:       (tq, NX)     VMEM scratch: merged per-head outputs, bf16
    # negmask_ref: (tq, T)      VMEM scratch: additive mask for this tile, f32
    _, t, nx = x_ref.shape
    hd = nx // n_head
    j = pl.program_id(1)

    # --- c_attn: compute Q|K|V once per batch element (first query tile). ---
    # Column-chunked so the f32 accumulator never exceeds (T, cc) before being
    # bias-added and cast to bf16 into the scratch.
    @pl.when(j == 0)
    def _():
        x = x_ref[0].astype(jnp.bfloat16)                          # (T, NX)
        cc = nx if nx <= 512 else (512 if nx % 512 == 0 else nx)
        for c0 in range(0, 3 * nx, cc):
            acc = jnp.dot(x, wqkv_ref[:, c0:c0 + cc],
                          preferred_element_type=jnp.float32)      # (T, cc) f32
            acc = acc + bqkv_ref[0, c0:c0 + cc]
            qkv_ref[:, c0:c0 + cc] = acc.astype(jnp.bfloat16)

    # Additive mask for this query tile: one (tq,T) multiply per tile, staged
    # in VMEM so it is not a live traced value across the unrolled head loop.
    negmask_ref[...] = mask_ref[0].astype(jnp.float32) * jnp.float32(-10000.0)

    q_start = pl.multiple_of(j * tq, tq)

    # --- per-head attention (static unroll; state round-trips via scratch). --
    for h in range(n_head):
        q = qkv_ref[pl.ds(q_start, tq), h * hd:(h + 1) * hd]        # (tq, hd)
        k = qkv_ref[:, nx + h * hd: nx + (h + 1) * hd]              # (T,  hd)
        v = qkv_ref[:, 2 * nx + h * hd: 2 * nx + (h + 1) * hd]      # (T,  hd)

        # Q @ K^T as a contraction over the head dim (no materialized
        # transpose).  The 1/sqrt(hd) scale was folded into Q in the wrapper.
        s = lax.dot_general(q, k,
                            dimension_numbers=(((1,), (1,)), ((), ())),
                            preferred_element_type=jnp.float32)     # (tq, T)
        s = s + negmask_ref[...]

        # Softmax over keys with DEFERRED normalization: normalize the (tq,hd)
        # attention output instead of the (tq,T) probability matrix.
        m = jnp.max(s, axis=-1, keepdims=True)
        p = jnp.exp(s - m)                                          # (tq, T)
        l = jnp.sum(p, axis=-1, keepdims=True)                      # (tq, 1)
        a = jnp.dot(p.astype(jnp.bfloat16), v,
                    preferred_element_type=jnp.float32)             # (tq, hd)
        # NOTE: approx reciprocal => softmax rows normalized to ~1e-3 rel.
        a = a * pl.reciprocal(l, approx=True)
        a_ref[:, h * hd:(h + 1) * hd] = a.astype(jnp.bfloat16)      # merge

    # --- c_proj: single (tq,NX)@(NX,NX) GEMM after the head loop. -----------
    out = jnp.dot(a_ref[...], wproj_ref[...],
                  preferred_element_type=jnp.float32)
    o_ref[0] = (out + bproj_ref[0]).astype(o_ref.dtype)


def _choose_tq(t):
    """Query-tile size: multiple of 8 dividing T (full T for small sequences)."""
    if t <= 256:
        return t
    for cand in (256, 128, 64, 32, 16, 8):
        if t % cand == 0:
            return cand
    return t


def _vmem_limit_bytes(t, tq, nx):
    bf, f4 = 2, 4
    io = (2 * t * nx * f4          # x block (double-buffered across batch)
          + nx * 3 * nx * bf       # Wqkv  (Buffered(1))
          + 3 * nx * f4            # bqkv  (Buffered(1))
          + nx * nx * bf           # Wproj (Buffered(1))
          + nx * f4                # bproj (Buffered(1))
          + 2 * tq * t * bf        # mask tile (double-buffered)
          + 2 * tq * nx * f4)      # output tile (double-buffered)
    scratch = t * 3 * nx * bf + tq * nx * bf + tq * t * f4
    # compiler-managed temporaries: f32 logits / exp per head, c_attn chunk
    temps = 3 * tq * t * f4 + t * min(nx, 512) * f4
    want = io + scratch + temps
    try:
        cap = int(pltpu.get_tpu_info().vmem_capacity_bytes)
    except Exception:
        cap = 64 * 1024 * 1024     # conservative (v7x-sized) fallback
    # Generation-aware budget with headroom for Mosaic internal scratch/spills;
    # on 128-MiB parts (v5e/v6e) this rises well past the old 64-MiB cap.
    budget = max(32 * 1024 * 1024, cap - 16 * 1024 * 1024)
    return int(min(budget, max(32 * 1024 * 1024, 2 * want)))


def multi_head_attention(x, wqkv, bqkv, wproj, bproj, mask, *, n_head,
                         scale=True):
    b, t, nx = x.shape
    assert nx % n_head == 0
    hd = nx // n_head

    tq = _choose_tq(t)
    nq = t // tq

    # Fold the 1/sqrt(head_dim) attention scale into the Q projection
    # (done once in f32, before the bf16 cast): removes a (tq,T) VPU multiply
    # per head from the kernel.
    if scale:
        s = jnp.float32(1.0 / float(hd) ** 0.5)
        wqkv = jnp.concatenate([wqkv[:, :nx] * s, wqkv[:, nx:]], axis=1)
        bqkv = jnp.concatenate([bqkv[..., :nx] * s, bqkv[..., nx:]], axis=-1)

    # bf16 MXU operands (2x MXU rate on v6e/v7x, halves weight/mask DMA);
    # biases stay f32 and are added to the f32 accumulators.
    wqkv = wqkv.astype(jnp.bfloat16)
    wproj = wproj.astype(jnp.bfloat16)
    mask = mask.astype(jnp.bfloat16)           # 0/1 values are exact in bf16
    bqkv = bqkv.reshape(1, 3 * nx).astype(jnp.float32)
    bproj = bproj.reshape(1, nx).astype(jnp.float32)

    vmem_limit = _vmem_limit_bytes(t, tq, nx)
    kernel = functools.partial(_mha_kernel, n_head=n_head, tq=tq)

    return pl.pallas_call(
        kernel,
        out_shape=jax.ShapeDtypeStruct((b, t, nx), jnp.float32),
        grid_spec=pltpu.PrefetchScalarGridSpec(
            num_scalar_prefetch=0,
            grid=(b, nq),
            in_specs=[
                # x: full sequence, re-fetched only when the batch index moves.
                pl.BlockSpec((1, t, nx), lambda i, j: (i, 0, 0)),
                # Grid-invariant weights/biases: single-buffered.
                pl.BlockSpec((nx, 3 * nx), lambda i, j: (0, 0),
                             pipeline_mode=pl.Buffered(1)),
                pl.BlockSpec((1, 3 * nx), lambda i, j: (0, 0),
                             pipeline_mode=pl.Buffered(1)),
                pl.BlockSpec((nx, nx), lambda i, j: (0, 0),
                             pipeline_mode=pl.Buffered(1)),
                pl.BlockSpec((1, nx), lambda i, j: (0, 0),
                             pipeline_mode=pl.Buffered(1)),
                # mask: streamed one (tq, T) query slab per grid step.
                pl.BlockSpec((1, tq, t), lambda i, j: (i, j, 0)),
            ],
            out_specs=pl.BlockSpec((1, tq, nx), lambda i, j: (i, j, 0)),
            scratch_shapes=[
                pltpu.VMEM((t, 3 * nx), jnp.bfloat16),   # Q|K|V (whole seq)
                pltpu.VMEM((tq, nx), jnp.bfloat16),      # merged head outputs
                pltpu.VMEM((tq, t), jnp.float32),        # additive mask tile
            ],
        ),
        compiler_params=pltpu.CompilerParams(
            # q-tile axis MUST be sequential: qkv_ref is filled at j == 0 and
            # reused for the remaining query tiles of the same batch element.
            dimension_semantics=("parallel", "arbitrary"),
            vmem_limit_bytes=vmem_limit),
    )(x, wqkv, bqkv, wproj, bproj, mask)


def reference_mha(x, wqkv, bqkv, wproj, bproj, mask, *, n_head):
    """Pure-JAX f32 reference mirroring the PyTorch module."""
    b, t, nx = x.shape
    hd = nx // n_head
    qkv = x @ wqkv + bqkv
    q, k, v = jnp.split(qkv, 3, axis=-1)

    def split_heads(a):
        return a.reshape(b, t, n_head, hd).transpose(0, 2, 1, 3)

    q, k, v = split_heads(q), split_heads(k), split_heads(v)
    w = jnp.einsum('bhqd,bhkd->bhqk', q, k) / jnp.sqrt(jnp.float32(hd))
    w = w + (mask[:, None, :, :] * jnp.float32(-10000.0))
    w = jax.nn.softmax(w, axis=-1)
    a = jnp.einsum('bhqk,bhkd->bhqd', w, v)
    a = a.transpose(0, 2, 1, 3).reshape(b, t, nx)
    return a @ wproj + bproj


if __name__ == "__main__":
    # Small config: hidden_size=32, n_head=4, seq=8, batch=2
    B, T, NX, N_HEAD = 2, 8, 32, 4

    key = jax.random.PRNGKey(0)
    kx, kw1, kb1, kw2, kb2, km = jax.random.split(key, 6)

    x = jax.random.normal(kx, (B, T, NX), dtype=jnp.float32)
    wqkv = 0.02 * jax.random.normal(kw1, (NX, 3 * NX), dtype=jnp.float32)
    bqkv = 0.02 * jax.random.normal(kb1, (1, 3 * NX), dtype=jnp.float32)
    wproj = 0.02 * jax.random.normal(kw2, (NX, NX), dtype=jnp.float32)
    bproj = 0.02 * jax.random.normal(kb2, (1, NX), dtype=jnp.float32)

    # 3-D attention mask: 1 = masked position (scaled by -10000 in-kernel).
    mask = (jax.random.uniform(km, (B, T, T)) < 0.2).astype(jnp.float32)

    out = multi_head_attention(x, wqkv, bqkv, wproj, bproj, mask,
                               n_head=N_HEAD)
    out = jax.block_until_ready(out)

    ref = reference_mha(x, wqkv, bqkv[0], wproj, bproj[0], mask,
                        n_head=N_HEAD)
    assert out.shape == (B, T, NX)
    # Kernel uses bf16 MXU operands (f32 accumulation) plus an approx softmax
    # reciprocal; compare against the f32 reference with bf16 tolerance.
    assert jnp.allclose(out, ref, rtol=2e-2, atol=5e-3), "mismatch vs reference"
    print("KERNEL_OK")
</pallas_src>

<mosaic_0001>
module attributes {stable_mosaic.version = 11 : i64} {
  func.func @_mha_kernel(%arg0: i32, %arg1: i32, %arg2: memref<1x8x32xf32, #tpu.memory_space<vmem>>, %arg3: memref<32x96xbf16, #tpu.memory_space<vmem>>, %arg4: memref<1x96xf32, #tpu.memory_space<vmem>>, %arg5: memref<32x32xbf16, #tpu.memory_space<vmem>>, %arg6: memref<1x32xf32, #tpu.memory_space<vmem>>, %arg7: memref<1x8x8xbf16, #tpu.memory_space<vmem>>, %arg8: memref<1x8x32xf32, #tpu.memory_space<vmem>>, %arg9: memref<8x96xbf16, #tpu.memory_space<vmem>>, %arg10: memref<8x32xbf16, #tpu.memory_space<vmem>>, %arg11: memref<8x8xf32, #tpu.memory_space<vmem>>) attributes {dimension_semantics = [#tpu.dimension_semantics<parallel>, #tpu.dimension_semantics<arbitrary>], iteration_bounds = array<i64: 2, 1>, scalar_prefetch = 0 : i64, scratch_operands = 3 : i64, tpu.core_type = #tpu.core_type<tc>, window_params = [{transform_indices = @transform_0, window_bounds = array<i64: 1, 8, 32>}, {pipeline_mode = #tpu.pipeline_mode<synchronous>, transform_indices = @transform_1, window_bounds = array<i64: 32, 96>}, {pipeline_mode = #tpu.pipeline_mode<synchronous>, transform_indices = @transform_2, window_bounds = array<i64: 1, 96>}, {pipeline_mode = #tpu.pipeline_mode<synchronous>, transform_indices = @transform_3, window_bounds = array<i64: 32, 32>}, {pipeline_mode = #tpu.pipeline_mode<synchronous>, transform_indices = @transform_4, window_bounds = array<i64: 1, 32>}, {transform_indices = @transform_5, window_bounds = array<i64: 1, 8, 8>}, {transform_indices = @transform_6, window_bounds = array<i64: 1, 8, 32>}]} {
    %c0_i32 = arith.constant 0 : i32
    %0 = arith.cmpi eq, %arg1, %c0_i32 : i32
    %1 = arith.extui %0 : i1 to i32
    %c0_i32_0 = arith.constant 0 : i32
    %2 = arith.cmpi ne, %1, %c0_i32_0 : i32
    scf.if %2 {
      %c0_56 = arith.constant 0 : index
      %c0_57 = arith.constant 0 : index
      %c0_58 = arith.constant 0 : index
      %106 = vector.load %arg2[%c0_56, %c0_57, %c0_58] : memref<1x8x32xf32, #tpu.memory_space<vmem>>, vector<1x8x32xf32>
      %107 = vector.shape_cast %106 : vector<1x8x32xf32> to vector<8x32xf32>
      %108 = arith.truncf %107 : vector<8x32xf32> to vector<8x32xbf16>
      %c0_59 = arith.constant 0 : index
      %c0_60 = arith.constant 0 : index
      %109 = vector.load %arg3[%c0_59, %c0_60] : memref<32x96xbf16, #tpu.memory_space<vmem>>, vector<32x32xbf16>
      %cst_61 = arith.constant dense<0.000000e+00> : vector<8x32xf32>
      %110 = tpu.matmul %108, %109, %cst_61 {dimension_numbers = #tpu.dot_dimension_numbers<[1], [0], [0], [1], [0, 0, 1, 1], [], []>} : vector<8x32xbf16>, vector<32x32xbf16>, vector<8x32xf32> -> vector<8x32xf32>
      %c0_62 = arith.constant 0 : index
      %c0_63 = arith.constant 0 : index
      %111 = vector.load %arg4[%c0_62, %c0_63] : memref<1x96xf32, #tpu.memory_space<vmem>>, vector<1x32xf32>
      %112 = vector.shape_cast %111 : vector<1x32xf32> to vector<32xf32>
      %113 = vector.shape_cast %112 : vector<32xf32> to vector<1x32xf32>
      %114 = vector.broadcast %113 : vector<1x32xf32> to vector<8x32xf32>
      %115 = arith.addf %110, %114 : vector<8x32xf32>
      %116 = arith.truncf %115 : vector<8x32xf32> to vector<8x32xbf16>
      %c0_64 = arith.constant 0 : index
      %c0_65 = arith.constant 0 : index
      %117 = vector.load %arg9[%c0_64, %c0_65] : memref<8x96xbf16, #tpu.memory_space<vmem>>, vector<8x32xbf16>
      tpu.vector_store %arg9[%c0_64, %c0_65], %116 {strides = array<i32>} : memref<8x96xbf16, #tpu.memory_space<vmem>>, vector<8x32xbf16>,
      %c0_66 = arith.constant 0 : index
      %c32_67 = arith.constant 32 : index
      %118 = vector.load %arg3[%c0_66, %c32_67] : memref<32x96xbf16, #tpu.memory_space<vmem>>, vector<32x32xbf16>
      %cst_68 = arith.constant dense<0.000000e+00> : vector<8x32xf32>
      %119 = tpu.matmul %108, %118, %cst_68 {dimension_numbers = #tpu.dot_dimension_numbers<[1], [0], [0], [1], [0, 0, 1, 1], [], []>} : vector<8x32xbf16>, vector<32x32xbf16>, vector<8x32xf32> -> vector<8x32xf32>
      %c0_69 = arith.constant 0 : index
      %c32_70 = arith.constant 32 : index
      %120 = vector.load %arg4[%c0_69, %c32_70] : memref<1x96xf32, #tpu.memory_space<vmem>>, vector<1x32xf32>
      %121 = vector.shape_cast %120 : vector<1x32xf32> to vector<32xf32>
      %122 = vector.shape_cast %121 : vector<32xf32> to vector<1x32xf32>
      %123 = vector.broadcast %122 : vector<1x32xf32> to vector<8x32xf32>
      %124 = arith.addf %119, %123 : vector<8x32xf32>
      %125 = arith.truncf %124 : vector<8x32xf32> to vector<8x32xbf16>
      %c0_71 = arith.constant 0 : index
      %c32_72 = arith.constant 32 : index
      %126 = vector.load %arg9[%c0_71, %c32_72] : memref<8x96xbf16, #tpu.memory_space<vmem>>, vector<8x32xbf16>
      tpu.vector_store %arg9[%c0_71, %c32_72], %125 {strides = array<i32>} : memref<8x96xbf16, #tpu.memory_space<vmem>>, vector<8x32xbf16>,
      %c0_73 = arith.constant 0 : index
      %c64_74 = arith.constant 64 : index
      %127 = vector.load %arg3[%c0_73, %c64_74] : memref<32x96xbf16, #tpu.memory_space<vmem>>, vector<32x32xbf16>
      %cst_75 = arith.constant dense<0.000000e+00> : vector<8x32xf32>
      %128 = tpu.matmul %108, %127, %cst_75 {dimension_numbers = #tpu.dot_dimension_numbers<[1], [0], [0], [1], [0, 0, 1, 1], [], []>} : vector<8x32xbf16>, vector<32x32xbf16>, vector<8x32xf32> -> vector<8x32xf32>
      %c0_76 = arith.constant 0 : index
      %c64_77 = arith.constant 64 : index
      %129 = vector.load %arg4[%c0_76, %c64_77] : memref<1x96xf32, #tpu.memory_space<vmem>>, vector<1x32xf32>
      %130 = vector.shape_cast %129 : vector<1x32xf32> to vector<32xf32>
      %131 = vector.shape_cast %130 : vector<32xf32> to vector<1x32xf32>
      %132 = vector.broadcast %131 : vector<1x32xf32> to vector<8x32xf32>
      %133 = arith.addf %128, %132 : vector<8x32xf32>
      %134 = arith.truncf %133 : vector<8x32xf32> to vector<8x32xbf16>
      %c0_78 = arith.constant 0 : index
      %c64_79 = arith.constant 64 : index
      %135 = vector.load %arg9[%c0_78, %c64_79] : memref<8x96xbf16, #tpu.memory_space<vmem>>, vector<8x32xbf16>
      tpu.vector_store %arg9[%c0_78, %c64_79], %134 {strides = array<i32>} : memref<8x96xbf16, #tpu.memory_space<vmem>>, vector<8x32xbf16>,
    } else {
    }
    %c0 = arith.constant 0 : index
    %c0_1 = arith.constant 0 : index
    %c0_2 = arith.constant 0 : index
    %3 = vector.load %arg7[%c0, %c0_1, %c0_2] : memref<1x8x8xbf16, #tpu.memory_space<vmem>>, vector<1x8x8xbf16>
    %4 = vector.shape_cast %3 : vector<1x8x8xbf16> to vector<8x8xbf16>
    %5 = arith.extf %4 : vector<8x8xbf16> to vector<8x8xf32>
    %cst = arith.constant -1.000000e+04 : f32
    %6 = vector.broadcast %cst : f32 to vector<8x8xf32>
    %7 = arith.mulf %5, %6 : vector<8x8xf32>
    %c0_3 = arith.constant 0 : index
    %c0_4 = arith.constant 0 : index
    %8 = vector.load %arg11[%c0_3, %c0_4] : memref<8x8xf32, #tpu.memory_space<vmem>>, vector<8x8xf32>
    tpu.vector_store %arg11[%c0_3, %c0_4], %7 {strides = array<i32>} : memref<8x8xf32, #tpu.memory_space<vmem>>, vector<8x8xf32>,
    %c8_i32 = arith.constant 8 : i32
    %9 = arith.muli %arg1, %c8_i32 : i32
    %10 = tpu.assume_multiple %9, 8 : i32
    %11 = arith.index_cast %10 : i32 to index
    %c0_5 = arith.constant 0 : index
    %12 = vector.load %arg9[%11, %c0_5] : memref<8x96xbf16, #tpu.memory_space<vmem>>, vector<8x8xbf16>
    %c0_6 = arith.constant 0 : index
    %c32 = arith.constant 32 : index
    %13 = vector.load %arg9[%c0_6, %c32] : memref<8x96xbf16, #tpu.memory_space<vmem>>, vector<8x8xbf16>
    %c0_7 = arith.constant 0 : index
    %c64 = arith.constant 64 : index
    %14 = vector.load %arg9[%c0_7, %c64] : memref<8x96xbf16, #tpu.memory_space<vmem>>, vector<8x8xbf16>
    %cst_8 = arith.constant dense<0.000000e+00> : vector<8x8xf32>
    %15 = tpu.matmul %12, %13, %cst_8 {dimension_numbers = #tpu.dot_dimension_numbers<[1], [1], [0], [0], [0, 0, 1, 0], [], []>} : vector<8x8xbf16>, vector<8x8xbf16>, vector<8x8xf32> -> vector<8x8xf32>
    %c0_9 = arith.constant 0 : index
    %c0_10 = arith.constant 0 : index
    %16 = vector.load %arg11[%c0_9, %c0_10] : memref<8x8xf32, #tpu.memory_space<vmem>>, vector<8x8xf32>
    %17 = arith.addf %15, %16 : vector<8x8xf32>
    %cst_11 = arith.constant dense<0xFF800000> : vector<8xf32>
    %18 = vector.multi_reduction <maximumf>, %17, %cst_11 [1] : vector<8x8xf32> to vector<8xf32>
    %19 = vector.shape_cast %18 : vector<8xf32> to vector<8x1xf32>
    %20 = vector.broadcast %19 : vector<8x1xf32> to vector<8x8xf32>
    %21 = arith.subf %17, %20 : vector<8x8xf32>
    %22 = math.exp %21 : vector<8x8xf32>
    %cst_12 = arith.constant dense<0.000000e+00> : vector<8xf32>
    %23 = vector.multi_reduction <add>, %22, %cst_12 [1] : vector<8x8xf32> to vector<8xf32>
    %24 = vector.shape_cast %23 : vector<8xf32> to vector<8x1xf32>
    %25 = arith.truncf %22 : vector<8x8xf32> to vector<8x8xbf16>
    %cst_13 = arith.constant dense<0.000000e+00> : vector<8x8xf32>
    %26 = tpu.matmul %25, %14, %cst_13 {dimension_numbers = #tpu.dot_dimension_numbers<[1], [0], [0], [1], [0, 0, 1, 1], [], []>} : vector<8x8xbf16>, vector<8x8xbf16>, vector<8x8xf32> -> vector<8x8xf32>
    %27 = tpu.reciprocal %24 {approx = true} : vector<8x1xf32> -> vector<8x1xf32>
    %28 = vector.broadcast %27 : vector<8x1xf32> to vector<8x8xf32>
    %29 = arith.mulf %26, %28 : vector<8x8xf32>
    %30 = arith.truncf %29 : vector<8x8xf32> to vector<8x8xbf16>
    %c0_14 = arith.constant 0 : index
    %c0_15 = arith.constant 0 : index
    %31 = vector.load %arg10[%c0_14, %c0_15] : memref<8x32xbf16, #tpu.memory_space<vmem>>, vector<8x8xbf16>
    tpu.vector_store %arg10[%c0_14, %c0_15], %30 {strides = array<i32>} : memref<8x32xbf16, #tpu.memory_space<vmem>>, vector<8x8xbf16>,
    %32 = arith.index_cast %10 : i32 to index
    %c8 = arith.constant 8 : index
    %33 = vector.load %arg9[%32, %c8] : memref<8x96xbf16, #tpu.memory_space<vmem>>, vector<8x8xbf16>
    %c0_16 = arith.constant 0 : index
    %c40 = arith.constant 40 : index
    %34 = vector.load %arg9[%c0_16, %c40] : memref<8x96xbf16, #tpu.memory_space<vmem>>, vector<8x8xbf16>
    %c0_17 = arith.constant 0 : index
    %c72 = arith.constant 72 : index
    %35 = vector.load %arg9[%c0_17, %c72] : memref<8x96xbf16, #tpu.memory_space<vmem>>, vector<8x8xbf16>
    %cst_18 = arith.constant dense<0.000000e+00> : vector<8x8xf32>
    %36 = tpu.matmul %33, %34, %cst_18 {dimension_numbers = #tpu.dot_dimension_numbers<[1], [1], [0], [0], [0, 0, 1, 0], [], []>} : vector<8x8xbf16>, vector<8x8xbf16>, vector<8x8xf32> -> vector<8x8xf32>
    %c0_19 = arith.constant 0 : index
    %c0_20 = arith.constant 0 : index
    %37 = vector.load %arg11[%c0_19, %c0_20] : memref<8x8xf32, #tpu.memory_space<vmem>>, vector<8x8xf32>
    %38 = arith.addf %36, %37 : vector<8x8xf32>
    %cst_21 = arith.constant dense<0xFF800000> : vector<8xf32>
    %39 = vector.multi_reduction <maximumf>, %38, %cst_21 [1] : vector<8x8xf32> to vector<8xf32>
    %40 = vector.shape_cast %39 : vector<8xf32> to vector<8x1xf32>
    %41 = vector.broadcast %40 : vector<8x1xf32> to vector<8x8xf32>
    %42 = arith.subf %38, %41 : vector<8x8xf32>
    %43 = math.exp %42 : vector<8x8xf32>
    %cst_22 = arith.constant dense<0.000000e+00> : vector<8xf32>
    %44 = vector.multi_reduction <add>, %43, %cst_22 [1] : vector<8x8xf32> to vector<8xf32>
    %45 = vector.shape_cast %44 : vector<8xf32> to vector<8x1xf32>
    %46 = arith.truncf %43 : vector<8x8xf32> to vector<8x8xbf16>
    %cst_23 = arith.constant dense<0.000000e+00> : vector<8x8xf32>
    %47 = tpu.matmul %46, %35, %cst_23 {dimension_numbers = #tpu.dot_dimension_numbers<[1], [0], [0], [1], [0, 0, 1, 1], [], []>} : vector<8x8xbf16>, vector<8x8xbf16>, vector<8x8xf32> -> vector<8x8xf32>
    %48 = tpu.reciprocal %45 {approx = true} : vector<8x1xf32> -> vector<8x1xf32>
    %49 = vector.broadcast %48 : vector<8x1xf32> to vector<8x8xf32>
    %50 = arith.mulf %47, %49 : vector<8x8xf32>
    %51 = arith.truncf %50 : vector<8x8xf32> to vector<8x8xbf16>
    %c0_24 = arith.constant 0 : index
    %c8_25 = arith.constant 8 : index
    %52 = vector.load %arg10[%c0_24, %c8_25] : memref<8x32xbf16, #tpu.memory_space<vmem>>, vector<8x8xbf16>
    tpu.vector_store %arg10[%c0_24, %c8_25], %51 {strides = array<i32>} : memref<8x32xbf16, #tpu.memory_space<vmem>>, vector<8x8xbf16>,
    %53 = arith.index_cast %10 : i32 to index
    %c16 = arith.constant 16 : index
    %54 = vector.load %arg9[%53, %c16] : memref<8x96xbf16, #tpu.memory_space<vmem>>, vector<8x8xbf16>
    %c0_26 = arith.constant 0 : index
    %c48 = arith.constant 48 : index
    %55 = vector.load %arg9[%c0_26, %c48] : memref<8x96xbf16, #tpu.memory_space<vmem>>, vector<8x8xbf16>
    %c0_27 = arith.constant 0 : index
    %c80 = arith.constant 80 : index
    %56 = vector.load %arg9[%c0_27, %c80] : memref<8x96xbf16, #tpu.memory_space<vmem>>, vector<8x8xbf16>
    %cst_28 = arith.constant dense<0.000000e+00> : vector<8x8xf32>
    %57 = tpu.matmul %54, %55, %cst_28 {dimension_numbers = #tpu.dot_dimension_numbers<[1], [1], [0], [0], [0, 0, 1, 0], [], []>} : vector<8x8xbf16>, vector<8x8xbf16>, vector<8x8xf32> -> vector<8x8xf32>
    %c0_29 = arith.constant 0 : index
    %c0_30 = arith.constant 0 : index
    %58 = vector.load %arg11[%c0_29, %c0_30] : memref<8x8xf32, #tpu.memory_space<vmem>>, vector<8x8xf32>
    %59 = arith.addf %57, %58 : vector<8x8xf32>
    %cst_31 = arith.constant dense<0xFF800000> : vector<8xf32>
    %60 = vector.multi_reduction <maximumf>, %59, %cst_31 [1] : vector<8x8xf32> to vector<8xf32>
    %61 = vector.shape_cast %60 : vector<8xf32> to vector<8x1xf32>
    %62 = vector.broadcast %61 : vector<8x1xf32> to vector<8x8xf32>
    %63 = arith.subf %59, %62 : vector<8x8xf32>
    %64 = math.exp %63 : vector<8x8xf32>
    %cst_32 = arith.constant dense<0.000000e+00> : vector<8xf32>
    %65 = vector.multi_reduction <add>, %64, %cst_32 [1] : vector<8x8xf32> to vector<8xf32>
    %66 = vector.shape_cast %65 : vector<8xf32> to vector<8x1xf32>
    %67 = arith.truncf %64 : vector<8x8xf32> to vector<8x8xbf16>
    %cst_33 = arith.constant dense<0.000000e+00> : vector<8x8xf32>
    %68 = tpu.matmul %67, %56, %cst_33 {dimension_numbers = #tpu.dot_dimension_numbers<[1], [0], [0], [1], [0, 0, 1, 1], [], []>} : vector<8x8xbf16>, vector<8x8xbf16>, vector<8x8xf32> -> vector<8x8xf32>
    %69 = tpu.reciprocal %66 {approx = true} : vector<8x1xf32> -> vector<8x1xf32>
    %70 = vector.broadcast %69 : vector<8x1xf32> to vector<8x8xf32>
    %71 = arith.mulf %68, %70 : vector<8x8xf32>
    %72 = arith.truncf %71 : vector<8x8xf32> to vector<8x8xbf16>
    %c0_34 = arith.constant 0 : index
    %c16_35 = arith.constant 16 : index
    %73 = vector.load %arg10[%c0_34, %c16_35] : memref<8x32xbf16, #tpu.memory_space<vmem>>, vector<8x8xbf16>
    tpu.vector_store %arg10[%c0_34, %c16_35], %72 {strides = array<i32>} : memref<8x32xbf16, #tpu.memory_space<vmem>>, vector<8x8xbf16>,
    %74 = arith.index_cast %10 : i32 to index
    %c24 = arith.constant 24 : index
    %75 = vector.load %arg9[%74, %c24] : memref<8x96xbf16, #tpu.memory_space<vmem>>, vector<8x8xbf16>
    %c0_36 = arith.constant 0 : index
    %c56 = arith.constant 56 : index
    %76 = vector.load %arg9[%c0_36, %c56] : memref<8x96xbf16, #tpu.memory_space<vmem>>, vector<8x8xbf16>
    %c0_37 = arith.constant 0 : index
    %c88 = arith.constant 88 : index
    %77 = vector.load %arg9[%c0_37, %c88] : memref<8x96xbf16, #tpu.memory_space<vmem>>, vector<8x8xbf16>
    %cst_38 = arith.constant dense<0.000000e+00> : vector<8x8xf32>
    %78 = tpu.matmul %75, %76, %cst_38 {dimension_numbers = #tpu.dot_dimension_numbers<[1], [1], [0], [0], [0, 0, 1, 0], [], []>} : vector<8x8xbf16>, vector<8x8xbf16>, vector<8x8xf32> -> vector<8x8xf32>
    %c0_39 = arith.constant 0 : index
    %c0_40 = arith.constant 0 : index
    %79 = vector.load %arg11[%c0_39, %c0_40] : memref<8x8xf32, #tpu.memory_space<vmem>>, vector<8x8xf32>
    %80 = arith.addf %78, %79 : vector<8x8xf32>
    %cst_41 = arith.constant dense<0xFF800000> : vector<8xf32>
    %81 = vector.multi_reduction <maximumf>, %80, %cst_41 [1] : vector<8x8xf32> to vector<8xf32>
    %82 = vector.shape_cast %81 : vector<8xf32> to vector<8x1xf32>
    %83 = vector.broadcast %82 : vector<8x1xf32> to vector<8x8xf32>
    %84 = arith.subf %80, %83 : vector<8x8xf32>
    %85 = math.exp %84 : vector<8x8xf32>
    %cst_42 = arith.constant dense<0.000000e+00> : vector<8xf32>
    %86 = vector.multi_reduction <add>, %85, %cst_42 [1] : vector<8x8xf32> to vector<8xf32>
    %87 = vector.shape_cast %86 : vector<8xf32> to vector<8x1xf32>
    %88 = arith.truncf %85 : vector<8x8xf32> to vector<8x8xbf16>
    %cst_43 = arith.constant dense<0.000000e+00> : vector<8x8xf32>
    %89 = tpu.matmul %88, %77, %cst_43 {dimension_numbers = #tpu.dot_dimension_numbers<[1], [0], [0], [1], [0, 0, 1, 1], [], []>} : vector<8x8xbf16>, vector<8x8xbf16>, vector<8x8xf32> -> vector<8x8xf32>
    %90 = tpu.reciprocal %87 {approx = true} : vector<8x1xf32> -> vector<8x1xf32>
    %91 = vector.broadcast %90 : vector<8x1xf32> to vector<8x8xf32>
    %92 = arith.mulf %89, %91 : vector<8x8xf32>
    %93 = arith.truncf %92 : vector<8x8xf32> to vector<8x8xbf16>
    %c0_44 = arith.constant 0 : index
    %c24_45 = arith.constant 24 : index
    %94 = vector.load %arg10[%c0_44, %c24_45] : memref<8x32xbf16, #tpu.memory_space<vmem>>, vector<8x8xbf16>
    tpu.vector_store %arg10[%c0_44, %c24_45], %93 {strides = array<i32>} : memref<8x32xbf16, #tpu.memory_space<vmem>>, vector<8x8xbf16>,
    %c0_46 = arith.constant 0 : index
    %c0_47 = arith.constant 0 : index
    %95 = vector.load %arg10[%c0_46, %c0_47] : memref<8x32xbf16, #tpu.memory_space<vmem>>, vector<8x32xbf16>
    %c0_48 = arith.constant 0 : index
    %c0_49 = arith.constant 0 : index
    %96 = vector.load %arg5[%c0_48, %c0_49] : memref<32x32xbf16, #tpu.memory_space<vmem>>, vector<32x32xbf16>
    %cst_50 = arith.constant dense<0.000000e+00> : vector<8x32xf32>
    %97 = tpu.matmul %95, %96, %cst_50 {dimension_numbers = #tpu.dot_dimension_numbers<[1], [0], [0], [1], [0, 0, 1, 1], [], []>} : vector<8x32xbf16>, vector<32x32xbf16>, vector<8x32xf32> -> vector<8x32xf32>
    %c0_51 = arith.constant 0 : index
    %c0_52 = arith.constant 0 : index
    %98 = vector.load %arg6[%c0_51, %c0_52] : memref<1x32xf32, #tpu.memory_space<vmem>>, vector<1x32xf32>
    %99 = vector.shape_cast %98 : vector<1x32xf32> to vector<32xf32>
    %100 = vector.shape_cast %99 : vector<32xf32> to vector<1x32xf32>
    %101 = vector.broadcast %100 : vector<1x32xf32> to vector<8x32xf32>
    %102 = arith.addf %97, %101 : vector<8x32xf32>
    %c0_53 = arith.constant 0 : index
    %c0_54 = arith.constant 0 : index
    %c0_55 = arith.constant 0 : index
    %103 = vector.load %arg8[%c0_53, %c0_54, %c0_55] : memref<1x8x32xf32, #tpu.memory_space<vmem>>, vector<1x8x32xf32>
    %104 = vector.shape_cast %103 : vector<1x8x32xf32> to vector<8x32xf32>
    %105 = vector.shape_cast %102 : vector<8x32xf32> to vector<1x8x32xf32>
    tpu.vector_store %arg8[%c0_53, %c0_54, %c0_55], %105 {strides = array<i32>} : memref<1x8x32xf32, #tpu.memory_space<vmem>>, vector<1x8x32xf32>,
    return
  }
  func.func @transform_0(%arg0: i32, %arg1: i32) -> (i32, i32, i32) {
    %c0_i32 = arith.constant 0 : i32
    %c0_i32_0 = arith.constant 0 : i32
    %c0_i32_1 = arith.constant 0 : i32
    return %arg0, %c0_i32, %c0_i32_0 : i32, i32, i32
  }
  func.func @transform_1(%arg0: i32, %arg1: i32) -> (i32, i32) {
    %c0_i32 = arith.constant 0 : i32
    %c0_i32_0 = arith.constant 0 : i32
    %c0_i32_1 = arith.constant 0 : i32
    return %c0_i32, %c0_i32_0 : i32, i32
  }
  func.func @transform_2(%arg0: i32, %arg1: i32) -> (i32, i32) {
    %c0_i32 = arith.constant 0 : i32
    %c0_i32_0 = arith.constant 0 : i32
    %c0_i32_1 = arith.constant 0 : i32
    return %c0_i32, %c0_i32_0 : i32, i32
  }
  func.func @transform_3(%arg0: i32, %arg1: i32) -> (i32, i32) {
    %c0_i32 = arith.constant 0 : i32
    %c0_i32_0 = arith.constant 0 : i32
    %c0_i32_1 = arith.constant 0 : i32
    return %c0_i32, %c0_i32_0 : i32, i32
  }
  func.func @transform_4(%arg0: i32, %arg1: i32) -> (i32, i32) {
    %c0_i32 = arith.constant 0 : i32
    %c0_i32_0 = arith.constant 0 : i32
    %c0_i32_1 = arith.constant 0 : i32
    return %c0_i32, %c0_i32_0 : i32, i32
  }
  func.func @transform_5(%arg0: i32, %arg1: i32) -> (i32, i32, i32) {
    %c0_i32 = arith.constant 0 : i32
    %c0_i32_0 = arith.constant 0 : i32
    return %arg0, %arg1, %c0_i32 : i32, i32, i32
  }
  func.func @transform_6(%arg0: i32, %arg1: i32) -> (i32, i32, i32) {
    %c0_i32 = arith.constant 0 : i32
    %c0_i32_0 = arith.constant 0 : i32
    return %arg0, %arg1, %c0_i32 : i32, i32, i32
  }
}

</mosaic_0001>

<llo_original>
// kernel: tpu_custom_call.1
$region0: #{tpu_custom_call.1}
  #allocation0 [shape = 'u32[]', space=smem, size = 0x4, offset = 0x4, fixed_abs, tag = 'smem constant byte address 0x4 - core index']
  #allocation1 [shape = 'u32[144,128]{1,0:T(1,128)}', space=vmem, size = 0x12000, scoped, tag = 'internal scratch']
  #allocation2 [shape = 'bf16[8,96]{1,0:T(8,128)(2,1)}', space=vmem, size = 0x800, scoped, tag = 'scratch operand']
  #allocation3 [shape = 'bf16[8,32]{1,0:T(8,128)(2,1)}', space=vmem, size = 0x800, scoped, tag = 'scratch operand']
  #allocation4 [shape = 'f32[8,8]{1,0:T(8,128)}', space=vmem, size = 0x1000, scoped, tag = 'scratch operand']
  %s0 = inlined_call_operand.hbm [shape: f32[2,8,32], index: 0, kind: input, shape index: {}]
  %s1 = inlined_call_operand.hbm [shape: bf16[32,96], index: 1, kind: input, shape index: {}]
  %s2 = inlined_call_operand.vmem [shape: f32[1,96], index: 2, kind: input, shape index: {}]
  %s3 = inlined_call_operand.hbm [shape: bf16[32,32], index: 3, kind: input, shape index: {}]
  %s4 = inlined_call_operand.hbm [shape: f32[1,32], index: 4, kind: input, shape index: {}]
  %s5 = inlined_call_operand.vmem [shape: bf16[2,8,8], index: 5, kind: input, shape index: {}]
  %s6 = inlined_call_operand.hbm [shape: f32[2,8,32], index: 6, kind: output, shape index: {}]
  %s7 = sld [smem:[#allocation0]]
  $region77: #{tpu_custom_call.1} parent=0
    _
  %s9 = ssub.s32 1, %s7
  %s10 = scalar_select 0, %s9, %s7
  $region1: #{tpu_custom_call.1} parent=0
    #allocation5 [shape = 'u8[8192]{0}', space=vmem, size = 0x2000, scoped, tag = 'input window, operand 0']
    #allocation6 [shape = 's32[2]{0}', space=sflag, size = 0x8, scoped, tag = 'scoped memory for tpu_custom_call.1']
    #allocation7 [shape = 's32[2]{0}', space=sflag, size = 0x8, scoped, tag = 'scoped memory for tpu_custom_call.1']
    #allocation8 [shape = 'u8[8192]{0}', space=vmem, size = 0x2000, scoped, tag = 'input window, operand 1, single buffered']
    #allocation9 [shape = 's32[1]{0}', space=sflag, size = 0x4, scoped, tag = 'scoped memory for tpu_custom_call.1']
    #allocation10 [shape = 'u8[8192]{0}', space=vmem, size = 0x2000, scoped, tag = 'input window, operand 3, single buffered']
    #allocation11 [shape = 'u8[512]{0}', space=vmem, size = 0x400, scoped, tag = 'input window, operand 4, single buffered']
    #allocation12 [shape = 's32[1]{0}', space=sflag, size = 0x4, scoped, tag = 'scoped memory for tpu_custom_call.1']
    #allocation13 [shape = 'u8[8192]{0}', space=vmem, size = 0x2000, scoped, tag = 'output window, operand 0']
    %11 = vsyncpa [#allocation6], 0
    %s12 = scalar_lea.sflag [#allocation6], 1
    %13 = vsyncpa %s12, 0
    %14 = vsyncpa [#allocation9], 0
    %15 = vsyncpa [#allocation12], 0
    %16 = vsyncpa [#allocation7], 0
    %s17 = scalar_lea.sflag [#allocation7], 1
    %18 = vsyncpa %s17, 0
    loop: start=0, step=1, limit=4
    $region2: #{tpu_custom_call.1} parent=1 // loop_pre_header
      _
    $region3: #{tpu_custom_call.1} parent=1 // loop_header
      %s20 = sphi 0, %s24
      %p21 = scmp.ge.s32.totalorder %s20, 4
      %s27 = sphi 0, %s39
      %s28 = sphi 0, %s35
      %s29 = sphi 0, %s27
      %s30 = sphi 0, %s28
      %s31 = sphi 0, %s29
      %s32 = sphi 0, %s30
      %s42 = sphi 0, %s44
      %s45 = sphi 0, %s42
      %s46 = sphi 0, %s45
      %s62 = sphi 0, %s46
      %s66 = sphi 0, %s66
      %s68 = sphi 0, %s66
      %s69 = sphi 0, %s68
      %s83 = sphi 0, %s69
      %s87 = sphi 0, %s87
      %s89 = sphi 0, %s87
      %s90 = sphi 0, %s89
      %s104 = sphi 0, %s90
      %s108 = sphi 0, %s108
      %s110 = sphi 0, %s108
      %s111 = sphi 0, %s110
      %s125 = sphi 0, %s111
      %s129 = sphi 0, %s129
      %s131 = sphi 0, %s129
      %s132 = sphi 0, %s131
      %s146 = sphi 0, %s132
      %s154 = sphi 0, %s156
      %s157 = sphi 0, %s154
      %s158 = sphi 0, %s157
      %s174 = sphi 0, %s158
      %s182 = sphi 0, %s184
      %s185 = sphi 0, %s182
      %s186 = sphi 0, %s185
      %s202 = sphi 0, %s186
    $region4: #{tpu_custom_call.1} parent=1 // loop_header_branch
      %23 = sbr.rel (%p21) target = $region8
    $region5: #{tpu_custom_call.1} parent=1 // loop_body
      %s25 = ssub.s32 %s20, 1
      %s26 = ssub.s32 %s20, 2
      %s33 = sadd.s32 1, %s28
      %p34 = scmp.ge.s32.totalorder %s33, 1
      %s35 = scalar_select %p34, 0, %s33
      %s36 = sadd.s32 1, %s27
      %s37 = scalar_select %p34, %s36, %s27
      %p38 = scmp.ge.s32.totalorder %s37, 2
      %s39 = scalar_select %p38, 0, %s37
      %s40 = ssub.s32 %s27, %s39
      %p41 = scmp.eq.s32.totalorder %s40, 0
      %s43 = sadd.s32 %s42, 1
      %s44 = scalar_select %p41, %s42, %s43
      %p47 = pneg %p41
      %p48 = scmp.eq.s32.totalorder %s20, 1
      %p49 = por %p47, %p48
      %p50 = scmp.ne.s32.totalorder %s42, %s45
      %p51 = scmp.eq.s32.totalorder %s20, 0
      %p52 = por %p50, %p51
      %p53 = scmp.ne.s32.totalorder %s42, %s45
      %p54 = scmp.eq.s32.totalorder %s25, 1
      %p55 = por %p53, %p54
      %p56 = scmp.ne.s32.totalorder %s45, %s46
      %p57 = scmp.eq.s32.totalorder %s25, 0
      %p58 = por %p56, %p57
      %p59 = scmp.ne.s32.totalorder %s45, %s46
      %p60 = scmp.eq.s32.totalorder %s26, 1
      %p61 = por %p59, %p60
      %p63 = scmp.ne.s32.totalorder %s46, %s62
      %p64 = scmp.eq.s32.totalorder %s26, 0
      %p65 = por %p63, %p64
      %s67 = sadd.s32 %s66, 1
      %p70 = scmp.eq.s32.totalorder %s20, 1
      %p71 = scmp.ne.s32.totalorder %s66, %s68
      %p72 = scmp.eq.s32.totalorder %s20, 0
      %p73 = por %p71, %p72
      %p74 = scmp.ne.s32.totalorder %s66, %s68
      %p75 = scmp.eq.s32.totalorder %s25, 1
      %p76 = por %p74, %p75
      %p77 = scmp.ne.s32.totalorder %s68, %s69
      %p78 = scmp.eq.s32.totalorder %s25, 0
      %p79 = por %p77, %p78
      %p80 = scmp.ne.s32.totalorder %s68, %s69
      %p81 = scmp.eq.s32.totalorder %s26, 1
      %p82 = por %p80, %p81
      %p84 = scmp.ne.s32.totalorder %s69, %s83
      %p85 = scmp.eq.s32.totalorder %s26, 0
      %p86 = por %p84, %p85
      %s88 = sadd.s32 %s87, 1
      %p91 = scmp.eq.s32.totalorder %s20, 1
      %p92 = scmp.ne.s32.totalorder %s87, %s89
      %p93 = scmp.eq.s32.totalorder %s20, 0
      %p94 = por %p92, %p93
      %p95 = scmp.ne.s32.totalorder %s87, %s89
      %p96 = scmp.eq.s32.totalorder %s25, 1
      %p97 = por %p95, %p96
      %p98 = scmp.ne.s32.totalorder %s89, %s90
      %p99 = scmp.eq.s32.totalorder %s25, 0
      %p100 = por %p98, %p99
      %p101 = scmp.ne.s32.totalorder %s89, %s90
      %p102 = scmp.eq.s32.totalorder %s26, 1
      %p103 = por %p101, %p102
      %p105 = scmp.ne.s32.totalorder %s90, %s104
      %p106 = scmp.eq.s32.totalorder %s26, 0
      %p107 = por %p105, %p106
      %s109 = sadd.s32 %s108, 1
      %p112 = scmp.eq.s32.totalorder %s20, 1
      %p113 = scmp.ne.s32.totalorder %s108, %s110
      %p114 = scmp.eq.s32.totalorder %s20, 0
      %p115 = por %p113, %p114
      %p116 = scmp.ne.s32.totalorder %s108, %s110
      %p117 = scmp.eq.s32.totalorder %s25, 1
      %p118 = por %p116, %p117
      %p119 = scmp.ne.s32.totalorder %s110, %s111
      %p120 = scmp.eq.s32.totalorder %s25, 0
      %p121 = por %p119, %p120
      %p122 = scmp.ne.s32.totalorder %s110, %s111
      %p123 = scmp.eq.s32.totalorder %s26, 1
      %p124 = por %p122, %p123
      %p126 = scmp.ne.s32.totalorder %s111, %s125
      %p127 = scmp.eq.s32.totalorder %s26, 0
      %p128 = por %p126, %p127
      %s130 = sadd.s32 %s129, 1
      %p133 = scmp.eq.s32.totalorder %s20, 1
      %p134 = scmp.ne.s32.totalorder %s129, %s131
      %p135 = scmp.eq.s32.totalorder %s20, 0
      %p136 = por %p134, %p135
      %p137 = scmp.ne.s32.totalorder %s129, %s131
      %p138 = scmp.eq.s32.totalorder %s25, 1
      %p139 = por %p137, %p138
      %p140 = scmp.ne.s32.totalorder %s131, %s132
      %p141 = scmp.eq.s32.totalorder %s25, 0
      %p142 = por %p140, %p141
      %p143 = scmp.ne.s32.totalorder %s131, %s132
      %p144 = scmp.eq.s32.totalorder %s26, 1
      %p145 = por %p143, %p144
      %p147 = scmp.ne.s32.totalorder %s132, %s146
      %p148 = scmp.eq.s32.totalorder %s26, 0
      %p149 = por %p147, %p148
      %s150 = ssub.s32 %s27, %s39
      %s151 = ssub.s32 %s28, %s35
      %s152 = sor.u32 %s150, %s151
      %p153 = scmp.eq.s32.totalorder %s152, 0
      %s155 = sadd.s32 %s154, 1
      %s156 = scalar_select %p153, %s154, %s155
      %p159 = pneg %p153
      %p160 = scmp.eq.s32.totalorder %s20, 1
      %p161 = por %p159, %p160
      %p162 = scmp.ne.s32.totalorder %s154, %s157
      %p163 = scmp.eq.s32.totalorder %s20, 0
      %p164 = por %p162, %p163
      %p165 = scmp.ne.s32.totalorder %s154, %s157
      %p166 = scmp.eq.s32.totalorder %s25, 1
      %p167 = por %p165, %p166
      %p168 = scmp.ne.s32.totalorder %s157, %s158
      %p169 = scmp.eq.s32.totalorder %s25, 0
      %p170 = por %p168, %p169
      %p171 = scmp.ne.s32.totalorder %s157, %s158
      %p172 = scmp.eq.s32.totalorder %s26, 1
      %p173 = por %p171, %p172
      %p175 = scmp.ne.s32.totalorder %s158, %s174
      %p176 = scmp.eq.s32.totalorder %s26, 0
      %p177 = por %p175, %p176
      %s178 = ssub.s32 %s27, %s39
      %s179 = ssub.s32 %s28, %s35
      %s180 = sor.u32 %s178, %s179
      %p181 = scmp.eq.s32.totalorder %s180, 0
      %s183 = sadd.s32 %s182, 1
      %s184 = scalar_select %p181, %s182, %s183
      %p187 = pneg %p181
      %p188 = scmp.eq.s32.totalorder %s20, 1
      %p189 = por %p187, %p188
      %p190 = scmp.ne.s32.totalorder %s182, %s185
      %p191 = scmp.eq.s32.totalorder %s20, 0
      %p192 = por %p190, %p191
      %p193 = scmp.ne.s32.totalorder %s182, %s185
      %p194 = scmp.eq.s32.totalorder %s25, 1
      %p195 = por %p193, %p194
      %p196 = scmp.ne.s32.totalorder %s185, %s186
      %p197 = scmp.eq.s32.totalorder %s25, 0
      %p198 = por %p196, %p197
      %p199 = scmp.ne.s32.totalorder %s185, %s186
      %p200 = scmp.eq.s32.totalorder %s26, 1
      %p201 = por %p199, %p200
      %p203 = scmp.ne.s32.totalorder %s186, %s202
      %p204 = scmp.eq.s32.totalorder %s26, 0
      %p205 = por %p203, %p204
      %p206 = scmp.le.s32.totalorder 1, %s20
      %p207 = scmp.lt.s32.totalorder %s20, 3
      %p208 = pnand %p206, %p207
      %p209 = pneg %p208
      // Predicated region
      $region9: #{tpu_custom_call.1} parent=5 // pred_check
        _
      $region10: #{tpu_custom_call.1} parent=5 // pred_check_branch
        %211 = sbr.rel (%p208) target = $region12
      $region11: #{tpu_custom_call.1} parent=5 // pred_region
        %s212 = ssub.s32 %s20, 1
        // Predicated region
        $region13: #{tpu_custom_call.1} parent=11 // pred_check
          %p213 = pneg %p79
        $region14: #{tpu_custom_call.1} parent=11 // pred_check_branch
          %215 = sbr.rel (%p213) target = $region16
        $region15: #{tpu_custom_call.1} parent=11 // pred_region
          %s217 = ssub.s32 256, 256
          %218 = vsyncadd [#allocation9], %s217
          %s219 = sshll.u32 [#allocation8], 4
          %s220 = int_to_ptr.vmem [resolvable:$true] %s219
          %225 = dma.hbm_to_vmem [thread:$0]  %s1, 256, %s220, [#allocation9], 64, 64, 4
        $region16: #{tpu_custom_call.1} parent=11 // pred_fallthru
          _
        // Predicated region
        $region17: #{tpu_custom_call.1} parent=11 // pred_check
          %p226 = pneg %p100
        $region18: #{tpu_custom_call.1} parent=11 // pred_check_branch
          %228 = sbr.rel (%p226) target = $region20
        $region19: #{tpu_custom_call.1} parent=11 // pred_region
          _
        $region20: #{tpu_custom_call.1} parent=11 // pred_fallthru
          _
        // Predicated region
        $region21: #{tpu_custom_call.1} parent=11 // pred_check
          %p229 = pneg %p121
        $region22: #{tpu_custom_call.1} parent=11 // pred_check_branch
          %231 = sbr.rel (%p229) target = $region24
        $region23: #{tpu_custom_call.1} parent=11 // pred_region
          %s233 = ssub.s32 256, 256
          %234 = vsyncadd [#allocation9], %s233
          %s235 = sshll.u32 [#allocation10], 4
          %s236 = int_to_ptr.vmem [resolvable:$true] %s235
          %241 = dma.hbm_to_vmem [thread:$0]  %s3, 256, %s236, [#allocation9], 64, 64, 4
        $region24: #{tpu_custom_call.1} parent=11 // pred_fallthru
          _
        // Predicated region
        $region25: #{tpu_custom_call.1} parent=11 // pred_check
          %p242 = pneg %p142
        $region26: #{tpu_custom_call.1} parent=11 // pred_check_branch
          %244 = sbr.rel (%p242) target = $region28
        $region27: #{tpu_custom_call.1} parent=11 // pred_region
          %s246 = ssub.s32 16, 16
          %247 = vsyncadd [#allocation12], %s246
          %s249 = sshll.u32 [#allocation11], 4
          %s250 = int_to_ptr.vmem [resolvable:$true] %s249
          %252 = dma.hbm_to_vmem [thread:$0]  %s4, 16, %s250, [#allocation12]
        $region28: #{tpu_custom_call.1} parent=11 // pred_fallthru
          _
      $region12: #{tpu_custom_call.1} parent=5 // pred_fallthru
        _
      %p253 = scmp.lt.s32.totalorder %s20, 2
      // Predicated region
      $region29: #{tpu_custom_call.1} parent=5 // pred_check
        %p254 = pneg %p253
      $region30: #{tpu_custom_call.1} parent=5 // pred_check_branch
        %256 = sbr.rel (%p254) target = $region32
      $region31: #{tpu_custom_call.1} parent=5 // pred_region
        // Predicated region
        $region33: #{tpu_custom_call.1} parent=31 // pred_check
          %p257 = pneg %p52
        $region34: #{tpu_custom_call.1} parent=31 // pred_check_branch
          %259 = sbr.rel (%p257) target = $region36
        $region35: #{tpu_custom_call.1} parent=31 // pred_region
          %s260 = sand.u32 %s42, 1
          %s261 = scalar_lea.sflag [#allocation6], %s260
          %s262 = sand.u32 %s42, 1
          %s263 = smul.addr %s262, 8
          %s264 = scalar_lea.vmem [#allocation5], %s263
          %s266 = ssub.s32 128, 128
          %267 = vsyncadd %s261, %s266
          %s268 = smul.addr %s27, 128
          %s269 = scalar_lea.hbm %s0, %s268
          %s271 = sshll.u32 %s264, 4
          %s272 = int_to_ptr.vmem [resolvable:$true] %s271
          %274 = dma.hbm_to_vmem [thread:$0]  %s269, 128, %s272, %s261
        $region36: #{tpu_custom_call.1} parent=31 // pred_fallthru
          _
        // Predicated region
        $region37: #{tpu_custom_call.1} parent=31 // pred_check
          %p275 = pneg %p164
        $region38: #{tpu_custom_call.1} parent=31 // pred_check_branch
          %277 = sbr.rel (%p275) target = $region40
        $region39: #{tpu_custom_call.1} parent=31 // pred_region
          %p278 = scmp.lt.s32.totalorder %s27, 1
          %s279 = scalar_select %p278, %s27, 1
          %p280 = scmp.lt.s32.totalorder %s28, 0
          %s281 = scalar_select %p280, %s28, 0
          %s282 = sadd.s32 %s281, %s279
          %s283 = smul.addr %s282, 4
          %s284 = scalar_lea.vmem %s5, %s283
        $region40: #{tpu_custom_call.1} parent=31 // pred_fallthru
          _
      $region32: #{tpu_custom_call.1} parent=5 // pred_fallthru
        _
      %p285 = scmp.le.s32.totalorder 1, %s20
      %p286 = scmp.lt.s32.totalorder %s20, 3
      %p287 = pnand %p285, %p286
      %p288 = pneg %p287
      // Predicated region
      $region41: #{tpu_custom_call.1} parent=5 // pred_check
        _
      $region42: #{tpu_custom_call.1} parent=5 // pred_check_branch
        %290 = sbr.rel (%p287) target = $region44
      $region43: #{tpu_custom_call.1} parent=5 // pred_region
        %s291 = ssub.s32 %s20, 1
        %s292 = sand.u32 %s45, 1
        %s293 = scalar_lea.sflag [#allocation6], %s292
        %s294 = sand.u32 %s45, 1
        %s295 = smul.addr %s294, 8
        %s296 = scalar_lea.vmem [#allocation5], %s295
        // Predicated region
        $region45: #{tpu_custom_call.1} parent=43 // pred_check
          %p297 = pneg %p58
        $region46: #{tpu_custom_call.1} parent=43 // pred_check_branch
          %299 = sbr.rel (%p297) target = $region48
        $region47: #{tpu_custom_call.1} parent=43 // pred_region
          %300 = dma.done %s293, 128
        $region48: #{tpu_custom_call.1} parent=43 // pred_fallthru
          _
        // Predicated region
        $region49: #{tpu_custom_call.1} parent=43 // pred_check
          %p301 = pneg %p79
        $region50: #{tpu_custom_call.1} parent=43 // pred_check_branch
          %303 = sbr.rel (%p301) target = $region52
        $region51: #{tpu_custom_call.1} parent=43 // pred_region
          %304 = dma.done [#allocation9], 256
        $region52: #{tpu_custom_call.1} parent=43 // pred_fallthru
          _
        // Predicated region
        $region53: #{tpu_custom_call.1} parent=43 // pred_check
          %p305 = pneg %p121
        $region54: #{tpu_custom_call.1} parent=43 // pred_check_branch
          %307 = sbr.rel (%p305) target = $region56
        $region55: #{tpu_custom_call.1} parent=43 // pred_region
          %308 = dma.done [#allocation9], 256
        $region56: #{tpu_custom_call.1} parent=43 // pred_fallthru
          _
        // Predicated region
        $region57: #{tpu_custom_call.1} parent=43 // pred_check
          %p309 = pneg %p142
        $region58: #{tpu_custom_call.1} parent=43 // pred_check_branch
          %311 = sbr.rel (%p309) target = $region60
        $region59: #{tpu_custom_call.1} parent=43 // pred_region
          %312 = dma.done [#allocation12], 16
        $region60: #{tpu_custom_call.1} parent=43 // pred_fallthru
          _
        %s313 = sand.u32 %s45, 1
        %s314 = scalar_lea.sflag [#allocation6], %s313
        %s315 = sand.u32 %s45, 1
        %s316 = smul.addr %s315, 8
        %s317 = scalar_lea.vmem [#allocation5], %s316
        %p318 = pneg %p58
        %p319 = pneg %p55
        %p320 = pneg %p79
        %p321 = pneg %p76
        %p322 = pneg %p100
        %p323 = pneg %p97
        %p324 = pneg %p121
        %p325 = pneg %p118
        %p326 = pneg %p142
        %p327 = pneg %p139
        %p328 = scmp.lt.s32.totalorder %s29, 1
        %s329 = scalar_select %p328, %s29, 1
        %p330 = scmp.lt.s32.totalorder %s30, 0
        %s331 = scalar_select %p330, %s30, 0
        %s332 = sadd.s32 %s331, %s329
        %s333 = smul.addr %s332, 4
        %s334 = scalar_lea.vmem %s5, %s333
        %p335 = pneg %p170
        %p336 = pneg %p167
        %p337 = pneg %p198
        %p338 = pneg %p195
        %s339 = sand.u32 %s185, 1
        %s340 = scalar_lea.sflag [#allocation7], %s339
        %s341 = sand.u32 %s185, 1
        %s342 = smul.addr %s341, 8
        %s343 = scalar_lea.vmem [#allocation13], %s342
        %p344 = scmp.lt.s32.totalorder %s29, 1
        %s345 = scalar_select %p344, %s29, 1
        %p346 = scmp.lt.s32.totalorder %s30, 0
        %s347 = scalar_select %p346, %s30, 0
        %s348 = sadd.s32 %s347, %s345
        %s349 = smul.addr %s348, 4
        %s350 = scalar_lea.vmem %s5, %s349
        %p352 = scmp.eq.s32.totalorder %s30, 0
        // Predicated region
        $region61: #{tpu_custom_call.1} parent=43 // pred_check
          %p353 = pneg %p352
        $region62: #{tpu_custom_call.1} parent=43 // pred_check_branch
          %355 = sbr.rel (%p353) target = $region64
        $region63: #{tpu_custom_call.1} parent=43 // pred_region
          %v356 = vld [vmem:[%s296] sm:$0xff]
          %v357 = vpack.c.bf16 %v356, %v356
          %v358 = vld [vmem:[#allocation8] sm:$0xf]
          %v359 = vld [vmem:[#allocation8 + $0x4] sm:$0xf]
          %v360 = vld [vmem:[#allocation8 + $0x8] sm:$0xf]
          %v361 = vld [vmem:[#allocation8 + $0xc] sm:$0xf]
          %v362 = vld [vmem:[%s2] sm:$0x1]
          %v364 = vlaneseq
          %v365 = vshrl.u32 %v364, 7
          %v366 = vsub.s32 0, %v365
          %v367 = vrot.slane %v362, %v366
          %v373 = vunpack.c.l.b16 %v358
          %v374 = vunpack.c.l.b16 %v359
          %v375 = vunpack.c.l.b16 %v360
          %v376 = vunpack.c.l.b16 %v361
          %v377 = vpack.c.b16 %v374, %v373
          %v378 = vpack.c.b16 %v376, %v375
          %vm381 = vcmask 261120
          %v383 = vsel %vm381, %v357, 0
          %385 = vmatprep.subr.bf16.mxu0 0
          %386 = vmatpush1.bf16.msra.mxu0 0
          %387 = vmatprep.subr.bf16.mxu0 0
          %388 = vmatpush1.bf16.msra.mxu0 0
          %389 = vmatprep.subr.bf16.mxu0 0
          %390 = vmatpush1.bf16.msra.mxu0 0
          %391 = vmatprep.subr.bf16.mxu0 0
          %392 = vmatpush1.bf16.msra.mxu0 0
          %393 = vmatprep.subr.bf16.mxu0 0
          %394 = vmatpush1.bf16.msra.mxu0 0
          %395 = vmatprep.subr.bf16.mxu0 0
          %396 = vmatpush1.bf16.msra.mxu0 0
          %397 = vmatprep.subr.bf16.mxu0 0
          %398 = vmatpush1.bf16.msra.mxu0 %v378
          %399 = vmatprep.subr.bf16.mxu0 0
          %400 = vmatpush1.bf16.msra.mxu0 %v377
          %401 = vmatprep.subr.bf16.mxu0 0
          %402 = vmatpush2.bf16.msra.mxu0 0
          %403 = vmatprep.subr.bf16.mxu0 0
          %404 = vmatpush2.bf16.msra.mxu0 0
          %405 = vmatprep.subr.bf16.mxu0 0
          %406 = vmatpush2.bf16.msra.mxu0 0
          %407 = vmatprep.subr.bf16.mxu0 0
          %408 = vmatpush2.bf16.msra.mxu0 0
          %409 = vmatprep.subr.bf16.mxu0 0
          %410 = vmatpush2.bf16.msra.mxu0 0
          %411 = vmatprep.subr.bf16.mxu0 0
          %412 = vmatpush2.bf16.msra.mxu0 0
          %413 = vmatprep.subr.bf16.mxu0 0
          %414 = vmatpush2.bf16.msra.mxu0 0
          %415 = vmatprep.subr.bf16.mxu0 0
          %416 = vmatpush2.bf16.msra.mxu0 0
          %417 = vmatprep.mubr.bf16.mxu0 0
          %418 = vmatmul.mubr.bf16.gmra.mxu0 %v383
          %v419 = vpop.f32.mrf.mxu0
          %v420 = vadd.f32 %v367, %v419
          %v421 = vpop.f32.mrf.mxu0
          %v422 = vpop.f32.mrf.mxu0
          %v423 = vpop.f32.mrf.mxu0
          %424 = vdwg.mxu0
          %v425 = vpack.c.bf16 %v420, %v420
          %vm426 = vcmask 257024
          %427 = vst.msk [vmem:[#allocation2] sm:$0xf] %vm426, %v425
          %v428 = vld [vmem:[#allocation8] sm:$0xf]
          %v429 = vld [vmem:[#allocation8 + $0x4] sm:$0xf]
          %v430 = vld [vmem:[#allocation8 + $0x8] sm:$0xf]
          %v431 = vld [vmem:[#allocation8 + $0xc] sm:$0xf]
          %v432 = vld [vmem:[%s2] sm:$0x1]
          %v434 = vlaneseq
          %v435 = vshrl.u32 %v434, 7
          %v436 = vsub.s32 0, %v435
          %v437 = vrot.slane %v432, %v436
          %v442 = vunpack.c.l.b16 %v428
          %v443 = vunpack.c.l.b16 %v429
          %v444 = vunpack.c.l.b16 %v430
          %v445 = vunpack.c.l.b16 %v431
          %v446 = vpack.c.b16 %v443, %v442
          %v447 = vpack.c.b16 %v445, %v444
          %448 = vrot.lane.b32.xlu0 %v446, 96
          %v449 = vpop.permute.xlu0 %448
          %450 = vrot.lane.b32.xlu0 %v447, 96
          %v451 = vpop.permute.xlu0 %450
          %454 = vrot.lane.b32.xlu0 %v437, 96
          %v455 = vpop.permute.xlu0 %454
          %457 = vmatprep.subr.bf16.mxu0 0
          %458 = vmatpush1.bf16.msra.mxu0 0
          %459 = vmatprep.subr.bf16.mxu0 0
          %460 = vmatpush1.bf16.msra.mxu0 0
          %461 = vmatprep.subr.bf16.mxu0 0
          %462 = vmatpush1.bf16.msra.mxu0 0
          %463 = vmatprep.subr.bf16.mxu0 0
          %464 = vmatpush1.bf16.msra.mxu0 0
          %465 = vmatprep.subr.bf16.mxu0 0
          %466 = vmatpush1.bf16.msra.mxu0 0
          %467 = vmatprep.subr.bf16.mxu0 0
          %468 = vmatpush1.bf16.msra.mxu0 0
          %469 = vmatprep.subr.bf16.mxu0 0
          %470 = vmatpush1.bf16.msra.mxu0 %v451
          %471 = vmatprep.subr.bf16.mxu0 0
          %472 = vmatpush1.bf16.msra.mxu0 %v449
          %473 = vmatprep.subr.bf16.mxu0 0
          %474 = vmatpush2.bf16.msra.mxu0 0
          %475 = vmatprep.subr.bf16.mxu0 0
          %476 = vmatpush2.bf16.msra.mxu0 0
          %477 = vmatprep.subr.bf16.mxu0 0
          %478 = vmatpush2.bf16.msra.mxu0 0
          %479 = vmatprep.subr.bf16.mxu0 0
          %480 = vmatpush2.bf16.msra.mxu0 0
          %481 = vmatprep.subr.bf16.mxu0 0
          %482 = vmatpush2.bf16.msra.mxu0 0
          %483 = vmatprep.subr.bf16.mxu0 0
          %484 = vmatpush2.bf16.msra.mxu0 0
          %485 = vmatprep.subr.bf16.mxu0 0
          %486 = vmatpush2.bf16.msra.mxu0 0
          %487 = vmatprep.subr.bf16.mxu0 0
          %488 = vmatpush2.bf16.msra.mxu0 0
          %489 = vmatprep.mubr.bf16.mxu0 0
          %490 = vmatmul.mubr.bf16.gmra.mxu0 %v383
          %v491 = vpop.f32.mrf.mxu0
          %v492 = vadd.f32 %v455, %v491
          %v493 = vpop.f32.mrf.mxu0
          %v494 = vpop.f32.mrf.mxu0
          %v495 = vpop.f32.mrf.mxu0
          %496 = vdwg.mxu0
          %v497 = vpack.c.bf16 %v492, %v492
          %v499 = vunpack.c.l.b16 %v497
          %v500 = vpack.c.b16 %v499, %v499
          %501 = vrot.lane.b32.xlu0 %v500, 32
          %v502 = vpop.permute.xlu0 %501
          %vm504 = vcmask 519424
          %505 = vst.msk [vmem:[#allocation2] sm:$0xf] %vm504, %v502
          %v506 = vld [vmem:[#allocation8] sm:$0xf]
          %v507 = vld [vmem:[#allocation8 + $0x4] sm:$0xf]
          %v508 = vld [vmem:[#allocation8 + $0x8] sm:$0xf]
          %v509 = vld [vmem:[#allocation8 + $0xc] sm:$0xf]
          %v510 = vld [vmem:[%s2] sm:$0x1]
          %v512 = vlaneseq
          %v513 = vshrl.u32 %v512, 7
          %v514 = vsub.s32 0, %v513
          %v515 = vrot.slane %v510, %v514
          %v520 = vunpack.c.l.b16 %v506
          %v521 = vunpack.c.l.b16 %v507
          %v522 = vunpack.c.l.b16 %v508
          %v523 = vunpack.c.l.b16 %v509
          %v524 = vpack.c.b16 %v521, %v520
          %v525 = vpack.c.b16 %v523, %v522
          %526 = vrot.lane.b32.xlu0 %v524, 64
          %v527 = vpop.permute.xlu0 %526
          %528 = vrot.lane.b32.xlu0 %v525, 64
          %v529 = vpop.permute.xlu0 %528
          %532 = vrot.lane.b32.xlu0 %v515, 64
          %v533 = vpop.permute.xlu0 %532
          %535 = vmatprep.subr.bf16.mxu0 0
          %536 = vmatpush1.bf16.msra.mxu0 0
          %537 = vmatprep.subr.bf16.mxu0 0
          %538 = vmatpush1.bf16.msra.mxu0 0
          %539 = vmatprep.subr.bf16.mxu0 0
          %540 = vmatpush1.bf16.msra.mxu0 0
          %541 = vmatprep.subr.bf16.mxu0 0
          %542 = vmatpush1.bf16.msra.mxu0 0
          %543 = vmatprep.subr.bf16.mxu0 0
          %544 = vmatpush1.bf16.msra.mxu0 0
          %545 = vmatprep.subr.bf16.mxu0 0
          %546 = vmatpush1.bf16.msra.mxu0 0
          %547 = vmatprep.subr.bf16.mxu0 0
          %548 = vmatpush1.bf16.msra.mxu0 %v529
          %549 = vmatprep.subr.bf16.mxu0 0
          %550 = vmatpush1.bf16.msra.mxu0 %v527
          %551 = vmatprep.subr.bf16.mxu0 0
          %552 = vmatpush2.bf16.msra.mxu0 0
          %553 = vmatprep.subr.bf16.mxu0 0
          %554 = vmatpush2.bf16.msra.mxu0 0
          %555 = vmatprep.subr.bf16.mxu0 0
          %556 = vmatpush2.bf16.msra.mxu0 0
          %557 = vmatprep.subr.bf16.mxu0 0
          %558 = vmatpush2.bf16.msra.mxu0 0
          %559 = vmatprep.subr.bf16.mxu0 0
          %560 = vmatpush2.bf16.msra.mxu0 0
          %561 = vmatprep.subr.bf16.mxu0 0
          %562 = vmatpush2.bf16.msra.mxu0 0
          %563 = vmatprep.subr.bf16.mxu0 0
          %564 = vmatpush2.bf16.msra.mxu0 0
          %565 = vmatprep.subr.bf16.mxu0 0
          %566 = vmatpush2.bf16.msra.mxu0 0
          %567 = vmatprep.mubr.bf16.mxu0 0
          %568 = vmatmul.mubr.bf16.gmra.mxu0 %v383
          %v569 = vpop.f32.mrf.mxu0
          %v570 = vadd.f32 %v533, %v569
          %v571 = vpop.f32.mrf.mxu0
          %v572 = vpop.f32.mrf.mxu0
          %v573 = vpop.f32.mrf.mxu0
          %574 = vdwg.mxu0
          %v575 = vpack.c.bf16 %v570, %v570
          %v577 = vunpack.c.l.b16 %v575
          %v578 = vpack.c.b16 %v577, %v577
          %579 = vrot.lane.b32.xlu0 %v578, 64
          %v580 = vpop.permute.xlu0 %579
          %vm582 = vcmask 781824
          %583 = vst.msk [vmem:[#allocation2] sm:$0xf] %vm582, %v580
        $region64: #{tpu_custom_call.1} parent=43 // pred_fallthru
          _
        %v584 = vld [vmem:[%s350] sm:$0xf]
        %v585 = vunpack.c.l.bf16 %v584
        %v586 = vmul.f32 %v585, -10000.0
        %vm587 = vcmask 64512
        %588 = vst.msk [vmem:[#allocation4] sm:$0xff] %vm587, %v586
        %s589 = smul.u32 %s30, 8
        %s590 = sshra.s32 %s589, 3
        %s591 = sand.u32 %s589, 7
        %s592 = smul.addr %s590, 4
        %s593 = scalar_lea.vmem [#allocation2], %s592
        %v594 = vld [vmem:[%s593] sm:$0xf]
        %v595 = vld [vmem:[#allocation2] sm:$0xf]
        %v596 = vld [vmem:[#allocation4] sm:$0xff]
        %v598 = vunpack.c.l.b16 %v595
        %v599 = vpack.c.b16 %v598, %v598
        %600 = vrot.lane.b32.xlu0 %v599, 96
        %v601 = vpop.permute.xlu0 %600
        %v603 = vsel %vm587, %v594, 0
        %v606 = vsel %vm587, %v601, 0
        %608 = vmatprep.subr.bf16.mxu0 0
        %609 = vmatpush1.bf16.xpose.msra.mxu0 0
        %610 = vmatprep.subr.bf16.mxu0 0
        %611 = vmatpush1.bf16.xpose.msra.mxu0 0
        %612 = vmatprep.subr.bf16.mxu0 0
        %613 = vmatpush1.bf16.xpose.msra.mxu0 0
        %614 = vmatprep.subr.bf16.mxu0 0
        %615 = vmatpush1.bf16.xpose.msra.mxu0 0
        %616 = vmatprep.subr.bf16.mxu0 0
        %617 = vmatpush1.bf16.xpose.msra.mxu0 0
        %618 = vmatprep.subr.bf16.mxu0 0
        %619 = vmatpush1.bf16.xpose.msra.mxu0 0
        %620 = vmatprep.subr.bf16.mxu0 0
        %621 = vmatpush1.bf16.xpose.msra.mxu0 0
        %622 = vmatprep.subr.bf16.mxu0 0
        %623 = vmatpush1.bf16.xpose.msra.mxu0 %v606
        %624 = vmatprep.subr.bf16.mxu0 0
        %625 = vmatpush2.bf16.xpose.msra.mxu0 0
        %626 = vmatprep.subr.bf16.mxu0 0
        %627 = vmatpush2.bf16.xpose.msra.mxu0 0
        %628 = vmatprep.subr.bf16.mxu0 0
        %629 = vmatpush2.bf16.xpose.msra.mxu0 0
        %630 = vmatprep.subr.bf16.mxu0 0
        %631 = vmatpush2.bf16.xpose.msra.mxu0 0
        %632 = vmatprep.subr.bf16.mxu0 0
        %633 = vmatpush2.bf16.xpose.msra.mxu0 0
        %634 = vmatprep.subr.bf16.mxu0 0
        %635 = vmatpush2.bf16.xpose.msra.mxu0 0
        %636 = vmatprep.subr.bf16.mxu0 0
        %637 = vmatpush2.bf16.xpose.msra.mxu0 0
        %638 = vmatprep.subr.bf16.mxu0 0
        %639 = vmatpush2.bf16.xpose.msra.mxu0 0
        %640 = vmatprep.mubr.bf16.mxu0 0
        %641 = vmatmul.mubr.bf16.gmra.mxu0 %v603
        %v642 = vpop.f32.mrf.mxu0
        %v643 = vadd.f32 %v596, %v642
        %v644 = vpop.f32.mrf.mxu0
        %v645 = vpop.f32.mrf.mxu0
        %v646 = vpop.f32.mrf.mxu0
        %647 = vdwg.mxu0
        %v648 = vsel %vm587, %v643, -inf
        %649 = vmax.xlane.f32.xlu0 %v648
        %v650 = vpop.xlane.xlu0 %649
        %v651 = vsub.f32 %v643, %v650
        %v652 = vmul.f32 %v651, 1.442695
        %v653 = vpow.pop %v652
        %v654 = vsel %vm587, %v653, 0.0
        %655 = vadd.xlane.f32.xlu0 %v654
        %v656 = vpop.xlane.xlu0 %655
        %v657 = vpack.c.bf16 %v653, %v653
        %658 = vrot.lane.b32.xlu0 %v599, 64
        %v659 = vpop.permute.xlu0 %658
        %v661 = vsel %vm587, %v657, 0
        %vm663 = vcmask 1043456
        %v665 = vsel %vm663, %v659, 0
        %667 = vmatprep.subr.bf16.mxu0 0
        %668 = vmatpush1.bf16.msra.mxu0 0
        %669 = vmatprep.subr.bf16.mxu0 0
        %670 = vmatpush1.bf16.msra.mxu0 0
        %671 = vmatprep.subr.bf16.mxu0 0
        %672 = vmatpush1.bf16.msra.mxu0 0
        %673 = vmatprep.subr.bf16.mxu0 0
        %674 = vmatpush1.bf16.msra.mxu0 0
        %675 = vmatprep.subr.bf16.mxu0 0
        %676 = vmatpush1.bf16.msra.mxu0 0
        %677 = vmatprep.subr.bf16.mxu0 0
        %678 = vmatpush1.bf16.msra.mxu0 0
        %679 = vmatprep.subr.bf16.mxu0 0
        %680 = vmatpush1.bf16.msra.mxu0 0
        %681 = vmatprep.subr.bf16.mxu0 0
        %682 = vmatpush1.bf16.msra.mxu0 %v665
        %683 = vmatprep.subr.bf16.mxu0 0
        %684 = vmatpush2.bf16.msra.mxu0 0
        %685 = vmatprep.subr.bf16.mxu0 0
        %686 = vmatpush2.bf16.msra.mxu0 0
        %687 = vmatprep.subr.bf16.mxu0 0
        %688 = vmatpush2.bf16.msra.mxu0 0
        %689 = vmatprep.subr.bf16.mxu0 0
        %690 = vmatpush2.bf16.msra.mxu0 0
        %691 = vmatprep.subr.bf16.mxu0 0
        %692 = vmatpush2.bf16.msra.mxu0 0
        %693 = vmatprep.subr.bf16.mxu0 0
        %694 = vmatpush2.bf16.msra.mxu0 0
        %695 = vmatprep.subr.bf16.mxu0 0
        %696 = vmatpush2.bf16.msra.mxu0 0
        %697 = vmatprep.subr.bf16.mxu0 0
        %698 = vmatpush2.bf16.msra.mxu0 0
        %699 = vmatprep.mubr.bf16.mxu0 0
        %700 = vmatmul.mubr.bf16.gmra.mxu0 %v661
        %v701 = vpop.f32.mrf.mxu0
        %v702 = vadd.f32 0.0, %v701
        %v703 = vpop.f32.mrf.mxu0
        %v704 = vpop.f32.mrf.mxu0
        %v705 = vpop.f32.mrf.mxu0
        %706 = vdwg.mxu0
        %v707 = vrcp.pop %v656
        %v708 = vmul.f32 %v702, %v707
        %v709 = vpack.c.bf16 %v708, %v708
        %vm710 = vcmask 60416
        %711 = vst.msk [vmem:[#allocation3] sm:$0xf] %vm710, %v709
        %v712 = vld [vmem:[%s593] sm:$0xf]
        %v713 = vld [vmem:[#allocation2] sm:$0xf]
        %v714 = vld [vmem:[#allocation4] sm:$0xff]
        %v716 = vunpack.c.l.b16 %v712
        %v717 = vpack.c.b16 %v716, %v716
        %718 = vrot.lane.b32.xlu0 %v717, 120
        %v719 = vpop.permute.xlu0 %718
        %v721 = vunpack.c.l.b16 %v713
        %v722 = vpack.c.b16 %v721, %v721
        %723 = vrot.lane.b32.xlu0 %v722, 88
        %v724 = vpop.permute.xlu0 %723
        %v726 = vsel %vm587, %v719, 0
        %v729 = vsel %vm587, %v724, 0
        %731 = vmatprep.subr.bf16.mxu0 0
        %732 = vmatpush1.bf16.xpose.msra.mxu0 0
        %733 = vmatprep.subr.bf16.mxu0 0
        %734 = vmatpush1.bf16.xpose.msra.mxu0 0
        %735 = vmatprep.subr.bf16.mxu0 0
        %736 = vmatpush1.bf16.xpose.msra.mxu0 0
        %737 = vmatprep.subr.bf16.mxu0 0
        %738 = vmatpush1.bf16.xpose.msra.mxu0 0
        %739 = vmatprep.subr.bf16.mxu0 0
        %740 = vmatpush1.bf16.xpose.msra.mxu0 0
        %741 = vmatprep.subr.bf16.mxu0 0
        %742 = vmatpush1.bf16.xpose.msra.mxu0 0
        %743 = vmatprep.subr.bf16.mxu0 0
        %744 = vmatpush1.bf16.xpose.msra.mxu0 0
        %745 = vmatprep.subr.bf16.mxu0 0
        %746 = vmatpush1.bf16.xpose.msra.mxu0 %v729
        %747 = vmatprep.subr.bf16.mxu0 0
        %748 = vmatpush2.bf16.xpose.msra.mxu0 0
        %749 = vmatprep.subr.bf16.mxu0 0
        %750 = vmatpush2.bf16.xpose.msra.mxu0 0
        %751 = vmatprep.subr.bf16.mxu0 0
        %752 = vmatpush2.bf16.xpose.msra.mxu0 0
        %753 = vmatprep.subr.bf16.mxu0 0
        %754 = vmatpush2.bf16.xpose.msra.mxu0 0
        %755 = vmatprep.subr.bf16.mxu0 0
        %756 = vmatpush2.bf16.xpose.msra.mxu0 0
        %757 = vmatprep.subr.bf16.mxu0 0
        %758 = vmatpush2.bf16.xpose.msra.mxu0 0
        %759 = vmatprep.subr.bf16.mxu0 0
        %760 = vmatpush2.bf16.xpose.msra.mxu0 0
        %761 = vmatprep.subr.bf16.mxu0 0
        %762 = vmatpush2.bf16.xpose.msra.mxu0 0
        %763 = vmatprep.mubr.bf16.mxu0 0
        %764 = vmatmul.mubr.bf16.gmra.mxu0 %v726
        %v765 = vpop.f32.mrf.mxu0
        %v766 = vadd.f32 %v714, %v765
        %v767 = vpop.f32.mrf.mxu0
        %v768 = vpop.f32.mrf.mxu0
        %v769 = vpop.f32.mrf.mxu0
        %770 = vdwg.mxu0
        %v771 = vsel %vm587, %v766, -inf
        %772 = vmax.xlane.f32.xlu0 %v771
        %v773 = vpop.xlane.xlu0 %772
        %v774 = vsub.f32 %v766, %v773
        %v775 = vmul.f32 %v774, 1.442695
        %v776 = vpow.pop %v775
        %v777 = vsel %vm587, %v776, 0.0
        %778 = vadd.xlane.f32.xlu0 %v777
        %v779 = vpop.xlane.xlu0 %778
        %v780 = vpack.c.bf16 %v776, %v776
        %781 = vrot.lane.b32.xlu0 %v722, 56
        %v782 = vpop.permute.xlu0 %781
        %v784 = vsel %vm587, %v780, 0
        %v787 = vsel %vm663, %v782, 0
        %789 = vmatprep.subr.bf16.mxu0 0
        %790 = vmatpush1.bf16.msra.mxu0 0
        %791 = vmatprep.subr.bf16.mxu0 0
        %792 = vmatpush1.bf16.msra.mxu0 0
        %793 = vmatprep.subr.bf16.mxu0 0
        %794 = vmatpush1.bf16.msra.mxu0 0
        %795 = vmatprep.subr.bf16.mxu0 0
        %796 = vmatpush1.bf16.msra.mxu0 0
        %797 = vmatprep.subr.bf16.mxu0 0
        %798 = vmatpush1.bf16.msra.mxu0 0
        %799 = vmatprep.subr.bf16.mxu0 0
        %800 = vmatpush1.bf16.msra.mxu0 0
        %801 = vmatprep.subr.bf16.mxu0 0
        %802 = vmatpush1.bf16.msra.mxu0 0
        %803 = vmatprep.subr.bf16.mxu0 0
        %804 = vmatpush1.bf16.msra.mxu0 %v787
        %805 = vmatprep.subr.bf16.mxu0 0
        %806 = vmatpush2.bf16.msra.mxu0 0
        %807 = vmatprep.subr.bf16.mxu0 0
        %808 = vmatpush2.bf16.msra.mxu0 0
        %809 = vmatprep.subr.bf16.mxu0 0
        %810 = vmatpush2.bf16.msra.mxu0 0
        %811 = vmatprep.subr.bf16.mxu0 0
        %812 = vmatpush2.bf16.msra.mxu0 0
        %813 = vmatprep.subr.bf16.mxu0 0
        %814 = vmatpush2.bf16.msra.mxu0 0
        %815 = vmatprep.subr.bf16.mxu0 0
        %816 = vmatpush2.bf16.msra.mxu0 0
        %817 = vmatprep.subr.bf16.mxu0 0
        %818 = vmatpush2.bf16.msra.mxu0 0
        %819 = vmatprep.subr.bf16.mxu0 0
        %820 = vmatpush2.bf16.msra.mxu0 0
        %821 = vmatprep.mubr.bf16.mxu0 0
        %822 = vmatmul.mubr.bf16.gmra.mxu0 %v784
        %v823 = vpop.f32.mrf.mxu0
        %v824 = vadd.f32 0.0, %v823
        %v825 = vpop.f32.mrf.mxu0
        %v826 = vpop.f32.mrf.mxu0
        %v827 = vpop.f32.mrf.mxu0
        %828 = vdwg.mxu0
        %v829 = vrcp.pop %v779
        %v830 = vmul.f32 %v824, %v829
        %v831 = vpack.c.bf16 %v830, %v830
        %v833 = vunpack.c.l.b16 %v831
        %v834 = vpack.c.b16 %v833, %v833
        %835 = vrot.lane.b32.xlu0 %v834, 8
        %v836 = vpop.permute.xlu0 %835
        %vm838 = vcmask 126016
        %839 = vst.msk [vmem:[#allocation3] sm:$0xf] %vm838, %v836
        %v840 = vld [vmem:[%s593] sm:$0xf]
        %v841 = vld [vmem:[#allocation2] sm:$0xf]
        %v842 = vld [vmem:[#allocation4] sm:$0xff]
        %v844 = vunpack.c.l.b16 %v840
        %v845 = vpack.c.b16 %v844, %v844
        %846 = vrot.lane.b32.xlu0 %v845, 112
        %v847 = vpop.permute.xlu0 %846
        %v849 = vunpack.c.l.b16 %v841
        %v850 = vpack.c.b16 %v849, %v849
        %851 = vrot.lane.b32.xlu0 %v850, 80
        %v852 = vpop.permute.xlu0 %851
        %v854 = vsel %vm587, %v847, 0
        %v857 = vsel %vm587, %v852, 0
        %859 = vmatprep.subr.bf16.mxu0 0
        %860 = vmatpush1.bf16.xpose.msra.mxu0 0
        %861 = vmatprep.subr.bf16.mxu0 0
        %862 = vmatpush1.bf16.xpose.msra.mxu0 0
        %863 = vmatprep.subr.bf16.mxu0 0
        %864 = vmatpush1.bf16.xpose.msra.mxu0 0
        %865 = vmatprep.subr.bf16.mxu0 0
        %866 = vmatpush1.bf16.xpose.msra.mxu0 0
        %867 = vmatprep.subr.bf16.mxu0 0
        %868 = vmatpush1.bf16.xpose.msra.mxu0 0
        %869 = vmatprep.subr.bf16.mxu0 0
        %870 = vmatpush1.bf16.xpose.msra.mxu0 0
        %871 = vmatprep.subr.bf16.mxu0 0
        %872 = vmatpush1.bf16.xpose.msra.mxu0 0
        %873 = vmatprep.subr.bf16.mxu0 0
        %874 = vmatpush1.bf16.xpose.msra.mxu0 %v857
        %875 = vmatprep.subr.bf16.mxu0 0
        %876 = vmatpush2.bf16.xpose.msra.mxu0 0
        %877 = vmatprep.subr.bf16.mxu0 0
        %878 = vmatpush2.bf16.xpose.msra.mxu0 0
        %879 = vmatprep.subr.bf16.mxu0 0
        %880 = vmatpush2.bf16.xpose.msra.mxu0 0
        %881 = vmatprep.subr.bf16.mxu0 0
        %882 = vmatpush2.bf16.xpose.msra.mxu0 0
        %883 = vmatprep.subr.bf16.mxu0 0
        %884 = vmatpush2.bf16.xpose.msra.mxu0 0
        %885 = vmatprep.subr.bf16.mxu0 0
        %886 = vmatpush2.bf16.xpose.msra.mxu0 0
        %887 = vmatprep.subr.bf16.mxu0 0
        %888 = vmatpush2.bf16.xpose.msra.mxu0 0
        %889 = vmatprep.subr.bf16.mxu0 0
        %890 = vmatpush2.bf16.xpose.msra.mxu0 0
        %891 = vmatprep.mubr.bf16.mxu0 0
        %892 = vmatmul.mubr.bf16.gmra.mxu0 %v854
        %v893 = vpop.f32.mrf.mxu0
        %v894 = vadd.f32 %v842, %v893
        %v895 = vpop.f32.mrf.mxu0
        %v896 = vpop.f32.mrf.mxu0
        %v897 = vpop.f32.mrf.mxu0
        %898 = vdwg.mxu0
        %v899 = vsel %vm587, %v894, -inf
        %900 = vmax.xlane.f32.xlu0 %v899
        %v901 = vpop.xlane.xlu0 %900
        %v902 = vsub.f32 %v894, %v901
        %v903 = vmul.f32 %v902, 1.442695
        %v904 = vpow.pop %v903
        %v905 = vsel %vm587, %v904, 0.0
        %906 = vadd.xlane.f32.xlu0 %v905
        %v907 = vpop.xlane.xlu0 %906
        %v908 = vpack.c.bf16 %v904, %v904
        %909 = vrot.lane.b32.xlu0 %v850, 48
        %v910 = vpop.permute.xlu0 %909
        %v912 = vsel %vm587, %v908, 0
        %v915 = vsel %vm663, %v910, 0
        %917 = vmatprep.subr.bf16.mxu0 0
        %918 = vmatpush1.bf16.msra.mxu0 0
        %919 = vmatprep.subr.bf16.mxu0 0
        %920 = vmatpush1.bf16.msra.mxu0 0
        %921 = vmatprep.subr.bf16.mxu0 0
        %922 = vmatpush1.bf16.msra.mxu0 0
        %923 = vmatprep.subr.bf16.mxu0 0
        %924 = vmatpush1.bf16.msra.mxu0 0
        %925 = vmatprep.subr.bf16.mxu0 0
        %926 = vmatpush1.bf16.msra.mxu0 0
        %927 = vmatprep.subr.bf16.mxu0 0
        %928 = vmatpush1.bf16.msra.mxu0 0
        %929 = vmatprep.subr.bf16.mxu0 0
        %930 = vmatpush1.bf16.msra.mxu0 0
        %931 = vmatprep.subr.bf16.mxu0 0
        %932 = vmatpush1.bf16.msra.mxu0 %v915
        %933 = vmatprep.subr.bf16.mxu0 0
        %934 = vmatpush2.bf16.msra.mxu0 0
        %935 = vmatprep.subr.bf16.mxu0 0
        %936 = vmatpush2.bf16.msra.mxu0 0
        %937 = vmatprep.subr.bf16.mxu0 0
        %938 = vmatpush2.bf16.msra.mxu0 0
        %939 = vmatprep.subr.bf16.mxu0 0
        %940 = vmatpush2.bf16.msra.mxu0 0
        %941 = vmatprep.subr.bf16.mxu0 0
        %942 = vmatpush2.bf16.msra.mxu0 0
        %943 = vmatprep.subr.bf16.mxu0 0
        %944 = vmatpush2.bf16.msra.mxu0 0
        %945 = vmatprep.subr.bf16.mxu0 0
        %946 = vmatpush2.bf16.msra.mxu0 0
        %947 = vmatprep.subr.bf16.mxu0 0
        %948 = vmatpush2.bf16.msra.mxu0 0
        %949 = vmatprep.mubr.bf16.mxu0 0
        %950 = vmatmul.mubr.bf16.gmra.mxu0 %v912
        %v951 = vpop.f32.mrf.mxu0
        %v952 = vadd.f32 0.0, %v951
        %v953 = vpop.f32.mrf.mxu0
        %v954 = vpop.f32.mrf.mxu0
        %v955 = vpop.f32.mrf.mxu0
        %956 = vdwg.mxu0
        %v957 = vrcp.pop %v907
        %v958 = vmul.f32 %v952, %v957
        %v959 = vpack.c.bf16 %v958, %v958
        %v961 = vunpack.c.l.b16 %v959
        %v962 = vpack.c.b16 %v961, %v961
        %963 = vrot.lane.b32.xlu0 %v962, 16
        %v964 = vpop.permute.xlu0 %963
        %vm966 = vcmask 191616
        %967 = vst.msk [vmem:[#allocation3] sm:$0xf] %vm966, %v964
        %v968 = vld [vmem:[%s593] sm:$0xf]
        %v969 = vld [vmem:[#allocation2] sm:$0xf]
        %v970 = vld [vmem:[#allocation4] sm:$0xff]
        %v972 = vunpack.c.l.b16 %v968
        %v973 = vpack.c.b16 %v972, %v972
        %974 = vrot.lane.b32.xlu0 %v973, 104
        %v975 = vpop.permute.xlu0 %974
        %v977 = vunpack.c.l.b16 %v969
        %v978 = vpack.c.b16 %v977, %v977
        %979 = vrot.lane.b32.xlu0 %v978, 72
        %v980 = vpop.permute.xlu0 %979
        %v982 = vsel %vm587, %v975, 0
        %v985 = vsel %vm587, %v980, 0
        %987 = vmatprep.subr.bf16.mxu0 0
        %988 = vmatpush1.bf16.xpose.msra.mxu0 0
        %989 = vmatprep.subr.bf16.mxu0 0
        %990 = vmatpush1.bf16.xpose.msra.mxu0 0
        %991 = vmatprep.subr.bf16.mxu0 0
        %992 = vmatpush1.bf16.xpose.msra.mxu0 0
        %993 = vmatprep.subr.bf16.mxu0 0
        %994 = vmatpush1.bf16.xpose.msra.mxu0 0
        %995 = vmatprep.subr.bf16.mxu0 0
        %996 = vmatpush1.bf16.xpose.msra.mxu0 0
        %997 = vmatprep.subr.bf16.mxu0 0
        %998 = vmatpush1.bf16.xpose.msra.mxu0 0
        %999 = vmatprep.subr.bf16.mxu0 0
        %1000 = vmatpush1.bf16.xpose.msra.mxu0 0
        %1001 = vmatprep.subr.bf16.mxu0 0
        %1002 = vmatpush1.bf16.xpose.msra.mxu0 %v985
        %1003 = vmatprep.subr.bf16.mxu0 0
        %1004 = vmatpush2.bf16.xpose.msra.mxu0 0
        %1005 = vmatprep.subr.bf16.mxu0 0
        %1006 = vmatpush2.bf16.xpose.msra.mxu0 0
        %1007 = vmatprep.subr.bf16.mxu0 0
        %1008 = vmatpush2.bf16.xpose.msra.mxu0 0
        %1009 = vmatprep.subr.bf16.mxu0 0
        %1010 = vmatpush2.bf16.xpose.msra.mxu0 0
        %1011 = vmatprep.subr.bf16.mxu0 0
        %1012 = vmatpush2.bf16.xpose.msra.mxu0 0
        %1013 = vmatprep.subr.bf16.mxu0 0
        %1014 = vmatpush2.bf16.xpose.msra.mxu0 0
        %1015 = vmatprep.subr.bf16.mxu0 0
        %1016 = vmatpush2.bf16.xpose.msra.mxu0 0
        %1017 = vmatprep.subr.bf16.mxu0 0
        %1018 = vmatpush2.bf16.xpose.msra.mxu0 0
        %1019 = vmatprep.mubr.bf16.mxu0 0
        %1020 = vmatmul.mubr.bf16.gmra.mxu0 %v982
        %v1021 = vpop.f32.mrf.mxu0
        %v1022 = vadd.f32 %v970, %v1021
        %v1023 = vpop.f32.mrf.mxu0
        %v1024 = vpop.f32.mrf.mxu0
        %v1025 = vpop.f32.mrf.mxu0
        %1026 = vdwg.mxu0
        %v1027 = vsel %vm587, %v1022, -inf
        %1028 = vmax.xlane.f32.xlu0 %v1027
        %v1029 = vpop.xlane.xlu0 %1028
        %v1030 = vsub.f32 %v1022, %v1029
        %v1031 = vmul.f32 %v1030, 1.442695
        %v1032 = vpow.pop %v1031
        %v1033 = vsel %vm587, %v1032, 0.0
        %1034 = vadd.xlane.f32.xlu0 %v1033
        %v1035 = vpop.xlane.xlu0 %1034
        %v1036 = vpack.c.bf16 %v1032, %v1032
        %1037 = vrot.lane.b32.xlu0 %v978, 40
        %v1038 = vpop.permute.xlu0 %1037
        %v1040 = vsel %vm587, %v1036, 0
        %v1043 = vsel %vm663, %v1038, 0
        %1045 = vmatprep.subr.bf16.mxu0 0
        %1046 = vmatpush1.bf16.msra.mxu0 0
        %1047 = vmatprep.subr.bf16.mxu0 0
        %1048 = vmatpush1.bf16.msra.mxu0 0
        %1049 = vmatprep.subr.bf16.mxu0 0
        %1050 = vmatpush1.bf16.msra.mxu0 0
        %1051 = vmatprep.subr.bf16.mxu0 0
        %1052 = vmatpush1.bf16.msra.mxu0 0
        %1053 = vmatprep.subr.bf16.mxu0 0
        %1054 = vmatpush1.bf16.msra.mxu0 0
        %1055 = vmatprep.subr.bf16.mxu0 0
        %1056 = vmatpush1.bf16.msra.mxu0 0
        %1057 = vmatprep.subr.bf16.mxu0 0
        %1058 = vmatpush1.bf16.msra.mxu0 0
        %1059 = vmatprep.subr.bf16.mxu0 0
        %1060 = vmatpush1.bf16.msra.mxu0 %v1043
        %1061 = vmatprep.subr.bf16.mxu0 0
        %1062 = vmatpush2.bf16.msra.mxu0 0
        %1063 = vmatprep.subr.bf16.mxu0 0
        %1064 = vmatpush2.bf16.msra.mxu0 0
        %1065 = vmatprep.subr.bf16.mxu0 0
        %1066 = vmatpush2.bf16.msra.mxu0 0
        %1067 = vmatprep.subr.bf16.mxu0 0
        %1068 = vmatpush2.bf16.msra.mxu0 0
        %1069 = vmatprep.subr.bf16.mxu0 0
        %1070 = vmatpush2.bf16.msra.mxu0 0
        %1071 = vmatprep.subr.bf16.mxu0 0
        %1072 = vmatpush2.bf16.msra.mxu0 0
        %1073 = vmatprep.subr.bf16.mxu0 0
        %1074 = vmatpush2.bf16.msra.mxu0 0
        %1075 = vmatprep.subr.bf16.mxu0 0
        %1076 = vmatpush2.bf16.msra.mxu0 0
        %1077 = vmatprep.mubr.bf16.mxu0 0
        %1078 = vmatmul.mubr.bf16.gmra.mxu0 %v1040
        %v1079 = vpop.f32.mrf.mxu0
        %v1080 = vadd.f32 0.0, %v1079
        %v1081 = vpop.f32.mrf.mxu0
        %v1082 = vpop.f32.mrf.mxu0
        %v1083 = vpop.f32.mrf.mxu0
        %1084 = vdwg.mxu0
        %v1085 = vrcp.pop %v1035
        %v1086 = vmul.f32 %v1080, %v1085
        %v1087 = vpack.c.bf16 %v1086, %v1086
        %v1089 = vunpack.c.l.b16 %v1087
        %v1090 = vpack.c.b16 %v1089, %v1089
        %1091 = vrot.lane.b32.xlu0 %v1090, 24
        %v1092 = vpop.permute.xlu0 %1091
        %vm1094 = vcmask 257216
        %1095 = vst.msk [vmem:[#allocation3] sm:$0xf] %vm1094, %v1092
        %v1096 = vld [vmem:[#allocation3] sm:$0xf]
        %v1097 = vld [vmem:[#allocation10] sm:$0xf]
        %v1098 = vld [vmem:[#allocation10 + $0x4] sm:$0xf]
        %v1099 = vld [vmem:[#allocation10 + $0x8] sm:$0xf]
        %v1100 = vld [vmem:[#allocation10 + $0xc] sm:$0xf]
        %v1101 = vld [vmem:[#allocation11] sm:$0x1]
        %v1103 = vlaneseq
        %v1104 = vshrl.u32 %v1103, 7
        %v1105 = vsub.s32 0, %v1104
        %v1106 = vrot.slane %v1101, %v1105
        %v1112 = vunpack.c.l.b16 %v1097
        %v1113 = vunpack.c.l.b16 %v1098
        %v1114 = vunpack.c.l.b16 %v1099
        %v1115 = vunpack.c.l.b16 %v1100
        %v1116 = vpack.c.b16 %v1113, %v1112
        %v1117 = vpack.c.b16 %v1115, %v1114
        %vm1120 = vcmask 261120
        %v1122 = vsel %vm1120, %v1096, 0
        %1124 = vmatprep.subr.bf16.mxu0 0
        %1125 = vmatpush1.bf16.msra.mxu0 0
        %1126 = vmatprep.subr.bf16.mxu0 0
        %1127 = vmatpush1.bf16.msra.mxu0 0
        %1128 = vmatprep.subr.bf16.mxu0 0
        %1129 = vmatpush1.bf16.msra.mxu0 0
        %1130 = vmatprep.subr.bf16.mxu0 0
        %1131 = vmatpush1.bf16.msra.mxu0 0
        %1132 = vmatprep.subr.bf16.mxu0 0
        %1133 = vmatpush1.bf16.msra.mxu0 0
        %1134 = vmatprep.subr.bf16.mxu0 0
        %1135 = vmatpush1.bf16.msra.mxu0 0
        %1136 = vmatprep.subr.bf16.mxu0 0
        %1137 = vmatpush1.bf16.msra.mxu0 %v1117
        %1138 = vmatprep.subr.bf16.mxu0 0
        %1139 = vmatpush1.bf16.msra.mxu0 %v1116
        %1140 = vmatprep.subr.bf16.mxu0 0
        %1141 = vmatpush2.bf16.msra.mxu0 0
        %1142 = vmatprep.subr.bf16.mxu0 0
        %1143 = vmatpush2.bf16.msra.mxu0 0
        %1144 = vmatprep.subr.bf16.mxu0 0
        %1145 = vmatpush2.bf16.msra.mxu0 0
        %1146 = vmatprep.subr.bf16.mxu0 0
        %1147 = vmatpush2.bf16.msra.mxu0 0
        %1148 = vmatprep.subr.bf16.mxu0 0
        %1149 = vmatpush2.bf16.msra.mxu0 0
        %1150 = vmatprep.subr.bf16.mxu0 0
        %1151 = vmatpush2.bf16.msra.mxu0 0
        %1152 = vmatprep.subr.bf16.mxu0 0
        %1153 = vmatpush2.bf16.msra.mxu0 0
        %1154 = vmatprep.subr.bf16.mxu0 0
        %1155 = vmatpush2.bf16.msra.mxu0 0
        %1156 = vmatprep.mubr.bf16.mxu0 0
        %1157 = vmatmul.mubr.bf16.gmra.mxu0 %v1122
        %v1158 = vpop.f32.mrf.mxu0
        %v1159 = vadd.f32 %v1106, %v1158
        %v1160 = vpop.f32.mrf.mxu0
        %v1161 = vpop.f32.mrf.mxu0
        %v1162 = vpop.f32.mrf.mxu0
        %1163 = vdwg.mxu0
        %1164 = vst.msk [vmem:[%s343] sm:$0xff] %vm1120, %v1159
        %s1165 = sand.u32 %s185, 1
        %s1166 = scalar_lea.sflag [#allocation7], %s1165
        %s1167 = sand.u32 %s185, 1
        %s1168 = smul.addr %s1167, 8
        %s1169 = scalar_lea.vmem [#allocation13], %s1168
        // Predicated region
        $region65: #{tpu_custom_call.1} parent=43 // pred_check
          %p1170 = pneg %p195
        $region66: #{tpu_custom_call.1} parent=43 // pred_check_branch
          %1172 = sbr.rel (%p1170) target = $region68
        $region67: #{tpu_custom_call.1} parent=43 // pred_region
          %s1174 = ssub.s32 128, 128
          %1175 = vsyncadd %s1166, %s1174
          %s1176 = sadd.s32 %s30, %s29
          %s1177 = smul.addr %s1176, 128
          %s1178 = scalar_lea.hbm %s6, %s1177
          %s1180 = sshll.u32 %s1169, 4
          %s1181 = int_to_ptr.vmem [resolvable:$true] %s1180
          %1183 = dma.vmem_to_hbm [thread:$0]  %s1181, 128, %s1178, %s1166
        $region68: #{tpu_custom_call.1} parent=43 // pred_fallthru
          _
      $region44: #{tpu_custom_call.1} parent=5 // pred_fallthru
        _
      %p1184 = scmp.le.s32.totalorder 2, %s20
      // Predicated region
      $region69: #{tpu_custom_call.1} parent=5 // pred_check
        %p1185 = pneg %p1184
      $region70: #{tpu_custom_call.1} parent=5 // pred_check_branch
        %1187 = sbr.rel (%p1185) target = $region72
      $region71: #{tpu_custom_call.1} parent=5 // pred_region
        %s1188 = ssub.s32 %s20, 2
        // Predicated region
        $region73: #{tpu_custom_call.1} parent=71 // pred_check
          %p1189 = pneg %p201
        $region74: #{tpu_custom_call.1} parent=71 // pred_check_branch
          %1191 = sbr.rel (%p1189) target = $region76
        $region75: #{tpu_custom_call.1} parent=71 // pred_region
          %s1192 = sand.u32 %s186, 1
          %s1193 = scalar_lea.sflag [#allocation7], %s1192
          %s1194 = sand.u32 %s186, 1
          %s1195 = smul.addr %s1194, 8
          %s1196 = scalar_lea.vmem [#allocation13], %s1195
          %1197 = dma.done %s1193, 128
        $region76: #{tpu_custom_call.1} parent=71 // pred_fallthru
          _
      $region72: #{tpu_custom_call.1} parent=5 // pred_fallthru
        _
    $region6: #{tpu_custom_call.1} parent=1 // loop_footer
      %s24 = sadd.s32 1, %s20
    $region7: #{tpu_custom_call.1} parent=1 // loop_footer_branch
      %19 = sbr.rel target = $region3
    $region8: #{tpu_custom_call.1} parent=1 // loop_exit
      _
    %1198 = vsyncpa [#allocation6], 1
    %s1199 = scalar_lea.sflag [#allocation6], 1
    %1200 = vsyncpa %s1199, 1
    %1201 = vsyncpa [#allocation9], 1
    %1202 = vsyncpa [#allocation12], 1
    %1203 = vsyncpa [#allocation7], 1
    %s1204 = scalar_lea.sflag [#allocation7], 1
    %1205 = vsyncpa %s1204, 1

</llo_original>
